<compile_context>
chip_gen: v6e
topology: v6e:2x2x1
jax: 0.10.0
libtpu: 0.0.40
codegen_flags: <defaults>
</compile_context>

<pallas_src>
import jax
import jax.numpy as jnp
from jax.experimental import pallas as pl
from jax.experimental.pallas import tpu as pltpu

IMG_HEIGHT = 32
IMG_WIDTH = 32
IN_FEATURES = IMG_WIDTH * IMG_HEIGHT * 3  # 3072
HIDDEN = 50
OUT = 10

LANE = 128
HIDDEN_PAD = LANE   # 50 -> 128 (zero padded)
OUT_PAD = LANE      # 10 -> 128 (zero padded)

DEFAULT_TILE_B = 512  # 512*3072*2B = 3 MiB/tile (bf16), 6 MiB double-buffered


def _round_up(n, m):
    return ((n + m - 1) // m) * m


def _mlp_kernel(x_ref, w1_ref, b1_ref, w2_ref, b2_ref, w3_ref, b3_ref, o_ref):
    x = x_ref[...]                                            # (TB, 3072) bf16

    # fc1 + relu (dropout = identity in eval mode). bf16 x bf16 -> f32 acc.
    h1 = jnp.dot(x, w1_ref[...], preferred_element_type=jnp.float32) + b1_ref[...]
    h1 = jnp.maximum(h1, 0.0)                                 # padded lanes stay 0

    # fc2 + relu (dropout = identity in eval mode).
    h2 = jnp.dot(h1, w2_ref[...], preferred_element_type=jnp.float32) + b2_ref[...]
    h2 = jnp.maximum(h2, 0.0)

    # fc3 -> padded logits (lanes >= OUT are exactly 0 by construction).
    logits = jnp.dot(h2, w3_ref[...], preferred_element_type=jnp.float32) + b3_ref[...]

    # log_softmax over the 10 valid class lanes; padded lanes must not
    # pollute the max / sum, so mask them out.
    lane_idx = jax.lax.broadcasted_iota(jnp.int32, logits.shape, 1)
    valid = lane_idx < OUT
    masked = jnp.where(valid, logits, -jnp.inf)
    m = jnp.max(masked, axis=-1, keepdims=True)
    shifted = logits - m
    e = jnp.where(valid, jnp.exp(shifted), 0.0)
    lse = jnp.log(jnp.sum(e, axis=-1, keepdims=True))
    o_ref[...] = shifted - lse        # padded lanes hold junk; sliced in wrapper


def _pad_params(params):
    """Pad feature dims to 128 lanes; cast w1 to bf16 (pairs with bf16 x)."""
    w1, b1, w2, b2, w3, b3 = params
    w1p = jnp.pad(w1, ((0, 0), (0, HIDDEN_PAD - HIDDEN))).astype(jnp.bfloat16)
    b1p = jnp.pad(b1, (0, HIDDEN_PAD - HIDDEN)).reshape(1, HIDDEN_PAD).astype(jnp.float32)
    w2p = jnp.pad(w2, ((0, HIDDEN_PAD - HIDDEN), (0, HIDDEN_PAD - HIDDEN))).astype(jnp.float32)
    b2p = jnp.pad(b2, (0, HIDDEN_PAD - HIDDEN)).reshape(1, HIDDEN_PAD).astype(jnp.float32)
    w3p = jnp.pad(w3, ((0, HIDDEN_PAD - HIDDEN), (0, OUT_PAD - OUT))).astype(jnp.float32)
    b3p = jnp.pad(b3, (0, OUT_PAD - OUT)).reshape(1, OUT_PAD).astype(jnp.float32)
    return w1p, b1p, w2p, b2p, w3p, b3p


def net_forward(x_nchw, params, *, tile_b=DEFAULT_TILE_B):
    """x_nchw: (B, 3, 32, 32) -> (B, 10) log-probabilities."""
    w1p, b1p, w2p, b2p, w3p, b3p = _pad_params(params)

    B = x_nchw.shape[0]
    # Row-major flatten of contiguous NCHW == torch `x.view(-1, 3*32*32)`.
    x2d = x_nchw.reshape(B, IN_FEATURES).astype(jnp.bfloat16)

    # Batch tile: multiple of 16 (bf16 sublane packing), capped at tile_b.
    tb = min(tile_b, _round_up(B, 16))
    b_pad = _round_up(B, tb)
    if b_pad != B:
        x2d = jnp.pad(x2d, ((0, b_pad - B), (0, 0)))

    resident = lambda i: (0, 0)   # weights: same block every step -> no re-DMA
    out_pad = pl.pallas_call(
        _mlp_kernel,
        out_shape=jax.ShapeDtypeStruct((b_pad, OUT_PAD), jnp.float32),
        grid=(pl.cdiv(b_pad, tb),),
        in_specs=[
            pl.BlockSpec((tb, IN_FEATURES), lambda i: (i, 0)),   # streamed x
            pl.BlockSpec((IN_FEATURES, HIDDEN_PAD), resident),   # w1 (bf16)
            pl.BlockSpec((1, HIDDEN_PAD), resident),             # b1
            pl.BlockSpec((HIDDEN_PAD, HIDDEN_PAD), resident),    # w2
            pl.BlockSpec((1, HIDDEN_PAD), resident),             # b2
            pl.BlockSpec((HIDDEN_PAD, OUT_PAD), resident),       # w3
            pl.BlockSpec((1, OUT_PAD), resident),                # b3
        ],
        out_specs=pl.BlockSpec((tb, OUT_PAD), lambda i: (i, 0)),  # lane-dense
        compiler_params=pltpu.CompilerParams(
            dimension_semantics=("parallel",)),
    )(x2d, w1p, b1p, w2p, b2p, w3p, b3p)

    return out_pad[:B, :OUT]


def init_params(key):
    """torch.nn.Linear-style init (U[-1/sqrt(fan_in), +]), stored as (in, out)."""
    def linear(key, fan_in, fan_out):
        kw, kb = jax.random.split(key)
        bound = 1.0 / jnp.sqrt(jnp.float32(fan_in))
        w = jax.random.uniform(kw, (fan_in, fan_out), jnp.float32, -bound, bound)
        b = jax.random.uniform(kb, (fan_out,), jnp.float32, -bound, bound)
        return w, b

    k1, k2, k3 = jax.random.split(key, 3)
    w1, b1 = linear(k1, IN_FEATURES, HIDDEN)
    w2, b2 = linear(k2, HIDDEN, HIDDEN)
    w3, b3 = linear(k3, HIDDEN, OUT)
    return (w1, b1, w2, b2, w3, b3)


def _reference_forward(x_nchw, params):
    """Pure-JAX reference (f32) of the eval-mode forward, for a sanity check."""
    w1, b1, w2, b2, w3, b3 = params
    x = x_nchw.reshape(x_nchw.shape[0], IN_FEATURES).astype(jnp.float32)
    h1 = jnp.maximum(x @ w1 + b1, 0.0)
    h2 = jnp.maximum(h1 @ w2 + b2, 0.0)
    logits = h2 @ w3 + b3
    return jax.nn.log_softmax(logits, axis=-1)


if __name__ == "__main__":
    key = jax.random.PRNGKey(0)
    k_params, k_x = jax.random.split(key)

    params = init_params(k_params)
    # Small batch of NCHW images, consistent with the module's expected input.
    x = jax.random.normal(k_x, (2, 3, IMG_HEIGHT, IMG_WIDTH), dtype=jnp.float32)

    out = net_forward(x, params)
    jax.block_until_ready(out)

    assert out.shape == (2, OUT)
    # log_softmax rows should exponentiate-and-sum to 1.
    row_sums = jnp.sum(jnp.exp(out), axis=-1)
    assert bool(jnp.all(jnp.abs(row_sums - 1.0) < 1e-3))
    # Match the f32 reference to bf16-input tolerance.
    ref = _reference_forward(x, params)
    assert bool(jnp.all(jnp.abs(out - ref) < 5e-2))

    print("KERNEL_OK")
</pallas_src>

<mosaic_0001>
module attributes {stable_mosaic.version = 11 : i64} {
  func.func @_mlp_kernel(%arg0: i32, %arg1: memref<16x3072xbf16, #tpu.memory_space<vmem>>, %arg2: memref<3072x128xbf16, #tpu.memory_space<vmem>>, %arg3: memref<1x128xf32, #tpu.memory_space<vmem>>, %arg4: memref<128x128xf32, #tpu.memory_space<vmem>>, %arg5: memref<1x128xf32, #tpu.memory_space<vmem>>, %arg6: memref<128x128xf32, #tpu.memory_space<vmem>>, %arg7: memref<1x128xf32, #tpu.memory_space<vmem>>, %arg8: memref<16x128xf32, #tpu.memory_space<vmem>>) attributes {dimension_semantics = [#tpu.dimension_semantics<parallel>], iteration_bounds = array<i64: 1>, scalar_prefetch = 0 : i64, scratch_operands = 0 : i64, tpu.core_type = #tpu.core_type<tc>, window_params = [{transform_indices = @transform_0, window_bounds = array<i64: 16, 3072>}, {pipeline_mode = #tpu.pipeline_mode<synchronous>, transform_indices = @transform_1, window_bounds = array<i64: 3072, 128>}, {pipeline_mode = #tpu.pipeline_mode<synchronous>, transform_indices = @transform_2, window_bounds = array<i64: 1, 128>}, {pipeline_mode = #tpu.pipeline_mode<synchronous>, transform_indices = @transform_3, window_bounds = array<i64: 128, 128>}, {pipeline_mode = #tpu.pipeline_mode<synchronous>, transform_indices = @transform_4, window_bounds = array<i64: 1, 128>}, {pipeline_mode = #tpu.pipeline_mode<synchronous>, transform_indices = @transform_5, window_bounds = array<i64: 128, 128>}, {pipeline_mode = #tpu.pipeline_mode<synchronous>, transform_indices = @transform_6, window_bounds = array<i64: 1, 128>}, {transform_indices = @transform_7, window_bounds = array<i64: 16, 128>}]} {
    %c0 = arith.constant 0 : index
    %c0_0 = arith.constant 0 : index
    %0 = vector.load %arg1[%c0, %c0_0] : memref<16x3072xbf16, #tpu.memory_space<vmem>>, vector<16x3072xbf16>
    %c0_1 = arith.constant 0 : index
    %c0_2 = arith.constant 0 : index
    %1 = vector.load %arg2[%c0_1, %c0_2] : memref<3072x128xbf16, #tpu.memory_space<vmem>>, vector<3072x128xbf16>
    %cst = arith.constant dense<0.000000e+00> : vector<16x128xf32>
    %2 = tpu.matmul %0, %1, %cst {dimension_numbers = #tpu.dot_dimension_numbers<[1], [0], [0], [1], [0, 0, 1, 1], [], []>} : vector<16x3072xbf16>, vector<3072x128xbf16>, vector<16x128xf32> -> vector<16x128xf32>
    %c0_3 = arith.constant 0 : index
    %c0_4 = arith.constant 0 : index
    %3 = vector.load %arg3[%c0_3, %c0_4] : memref<1x128xf32, #tpu.memory_space<vmem>>, vector<1x128xf32>
    %4 = vector.broadcast %3 : vector<1x128xf32> to vector<16x128xf32>
    %5 = arith.addf %2, %4 : vector<16x128xf32>
    %cst_5 = arith.constant 0.000000e+00 : f32
    %6 = vector.broadcast %cst_5 : f32 to vector<16x128xf32>
    %7 = arith.maximumf %5, %6 : vector<16x128xf32>
    %c0_6 = arith.constant 0 : index
    %c0_7 = arith.constant 0 : index
    %8 = vector.load %arg4[%c0_6, %c0_7] : memref<128x128xf32, #tpu.memory_space<vmem>>, vector<128x128xf32>
    %cst_8 = arith.constant dense<0.000000e+00> : vector<16x128xf32>
    %9 = tpu.matmul %7, %8, %cst_8 {dimension_numbers = #tpu.dot_dimension_numbers<[1], [0], [0], [1], [0, 0, 1, 1], [], []>} : vector<16x128xf32>, vector<128x128xf32>, vector<16x128xf32> -> vector<16x128xf32>
    %c0_9 = arith.constant 0 : index
    %c0_10 = arith.constant 0 : index
    %10 = vector.load %arg5[%c0_9, %c0_10] : memref<1x128xf32, #tpu.memory_space<vmem>>, vector<1x128xf32>
    %11 = vector.broadcast %10 : vector<1x128xf32> to vector<16x128xf32>
    %12 = arith.addf %9, %11 : vector<16x128xf32>
    %cst_11 = arith.constant 0.000000e+00 : f32
    %13 = vector.broadcast %cst_11 : f32 to vector<16x128xf32>
    %14 = arith.maximumf %12, %13 : vector<16x128xf32>
    %c0_12 = arith.constant 0 : index
    %c0_13 = arith.constant 0 : index
    %15 = vector.load %arg6[%c0_12, %c0_13] : memref<128x128xf32, #tpu.memory_space<vmem>>, vector<128x128xf32>
    %cst_14 = arith.constant dense<0.000000e+00> : vector<16x128xf32>
    %16 = tpu.matmul %14, %15, %cst_14 {dimension_numbers = #tpu.dot_dimension_numbers<[1], [0], [0], [1], [0, 0, 1, 1], [], []>} : vector<16x128xf32>, vector<128x128xf32>, vector<16x128xf32> -> vector<16x128xf32>
    %c0_15 = arith.constant 0 : index
    %c0_16 = arith.constant 0 : index
    %17 = vector.load %arg7[%c0_15, %c0_16] : memref<1x128xf32, #tpu.memory_space<vmem>>, vector<1x128xf32>
    %18 = vector.broadcast %17 : vector<1x128xf32> to vector<16x128xf32>
    %19 = arith.addf %16, %18 : vector<16x128xf32>
    %20 = tpu.iota {dimensions = array<i32: 1>} : vector<16x128xi32>
    %c10_i32 = arith.constant 10 : i32
    %21 = vector.broadcast %c10_i32 : i32 to vector<16x128xi32>
    %22 = arith.cmpi slt, %20, %21 : vector<16x128xi32>
    %cst_17 = arith.constant 0xFF800000 : f32
    %23 = vector.broadcast %cst_17 : f32 to vector<16x128xf32>
    %24 = arith.select %22, %19, %23 : vector<16x128xi1>, vector<16x128xf32>
    %cst_18 = arith.constant dense<0xFF800000> : vector<16xf32>
    %25 = vector.multi_reduction <maximumf>, %24, %cst_18 [1] : vector<16x128xf32> to vector<16xf32>
    %26 = vector.shape_cast %25 : vector<16xf32> to vector<16x1xf32>
    %27 = vector.broadcast %26 : vector<16x1xf32> to vector<16x128xf32>
    %28 = arith.subf %19, %27 : vector<16x128xf32>
    %29 = math.exp %28 : vector<16x128xf32>
    %cst_19 = arith.constant 0.000000e+00 : f32
    %30 = vector.broadcast %cst_19 : f32 to vector<16x128xf32>
    %31 = arith.select %22, %29, %30 : vector<16x128xi1>, vector<16x128xf32>
    %cst_20 = arith.constant dense<0.000000e+00> : vector<16xf32>
    %32 = vector.multi_reduction <add>, %31, %cst_20 [1] : vector<16x128xf32> to vector<16xf32>
    %33 = vector.shape_cast %32 : vector<16xf32> to vector<16x1xf32>
    %34 = math.log %33 : vector<16x1xf32>
    %35 = vector.broadcast %34 : vector<16x1xf32> to vector<16x128xf32>
    %36 = arith.subf %28, %35 : vector<16x128xf32>
    %c0_21 = arith.constant 0 : index
    %c0_22 = arith.constant 0 : index
    %37 = vector.load %arg8[%c0_21, %c0_22] : memref<16x128xf32, #tpu.memory_space<vmem>>, vector<16x128xf32>
    tpu.vector_store %arg8[%c0_21, %c0_22], %36 {strides = array<i32>} : memref<16x128xf32, #tpu.memory_space<vmem>>, vector<16x128xf32>,
    return
  }
  func.func @transform_0(%arg0: i32) -> (i32, i32) {
    %c0_i32 = arith.constant 0 : i32
    %c0_i32_0 = arith.constant 0 : i32
    return %arg0, %c0_i32 : i32, i32
  }
  func.func @transform_1(%arg0: i32) -> (i32, i32) {
    %c0_i32 = arith.constant 0 : i32
    %c0_i32_0 = arith.constant 0 : i32
    %c0_i32_1 = arith.constant 0 : i32
    return %c0_i32, %c0_i32_0 : i32, i32
  }
  func.func @transform_2(%arg0: i32) -> (i32, i32) {
    %c0_i32 = arith.constant 0 : i32
    %c0_i32_0 = arith.constant 0 : i32
    %c0_i32_1 = arith.constant 0 : i32
    return %c0_i32, %c0_i32_0 : i32, i32
  }
  func.func @transform_3(%arg0: i32) -> (i32, i32) {
    %c0_i32 = arith.constant 0 : i32
    %c0_i32_0 = arith.constant 0 : i32
    %c0_i32_1 = arith.constant 0 : i32
    return %c0_i32, %c0_i32_0 : i32, i32
  }
  func.func @transform_4(%arg0: i32) -> (i32, i32) {
    %c0_i32 = arith.constant 0 : i32
    %c0_i32_0 = arith.constant 0 : i32
    %c0_i32_1 = arith.constant 0 : i32
    return %c0_i32, %c0_i32_0 : i32, i32
  }
  func.func @transform_5(%arg0: i32) -> (i32, i32) {
    %c0_i32 = arith.constant 0 : i32
    %c0_i32_0 = arith.constant 0 : i32
    %c0_i32_1 = arith.constant 0 : i32
    return %c0_i32, %c0_i32_0 : i32, i32
  }
  func.func @transform_6(%arg0: i32) -> (i32, i32) {
    %c0_i32 = arith.constant 0 : i32
    %c0_i32_0 = arith.constant 0 : i32
    %c0_i32_1 = arith.constant 0 : i32
    return %c0_i32, %c0_i32_0 : i32, i32
  }
  func.func @transform_7(%arg0: i32) -> (i32, i32) {
    %c0_i32 = arith.constant 0 : i32
    %c0_i32_0 = arith.constant 0 : i32
    return %arg0, %c0_i32 : i32, i32
  }
}

</mosaic_0001>

<llo_original>
// kernel: tpu_custom_call.1
$region0: #{tpu_custom_call.1}
  #allocation0 [shape = 'u32[]', space=smem, size = 0x4, offset = 0x4, fixed_abs, tag = 'smem constant byte address 0x4 - core index']
  #allocation1 [shape = 'u32[144,128]{1,0:T(1,128)}', space=vmem, size = 0x12000, scoped, tag = 'internal scratch']
  %s0 = inlined_call_operand.hbm [shape: bf16[16,3072], index: 0, kind: input, shape index: {}]
  %s1 = inlined_call_operand.hbm [shape: bf16[3072,128], index: 1, kind: input, shape index: {}]
  %s2 = inlined_call_operand.vmem [shape: f32[1,128], index: 2, kind: input, shape index: {}]
  %s3 = inlined_call_operand.hbm [shape: f32[128,128], index: 3, kind: input, shape index: {}]
  %s4 = inlined_call_operand.vmem [shape: f32[1,128], index: 4, kind: input, shape index: {}]
  %s5 = inlined_call_operand.hbm [shape: f32[128,128], index: 5, kind: input, shape index: {}]
  %s6 = inlined_call_operand.vmem [shape: f32[1,128], index: 6, kind: input, shape index: {}]
  %s7 = inlined_call_operand.hbm [shape: f32[16,128], index: 7, kind: output, shape index: {}]
  %s8 = sld [smem:[#allocation0]]
  $region54: #{tpu_custom_call.1} parent=0
    _
  %s10 = ssub.s32 1, %s8
  %s11 = scalar_select 0, %s10, %s8
  $region1: #{tpu_custom_call.1} parent=0
    #allocation2 [shape = 'u8[98304]{0}', space=vmem, size = 0x18000, scoped, tag = 'input window, operand 0, single buffered']
    #allocation3 [shape = 's32[1]{0}', space=sflag, size = 0x4, scoped, tag = 'scoped memory for tpu_custom_call.1']
    #allocation4 [shape = 's32[1]{0}', space=sflag, size = 0x4, scoped, tag = 'scoped memory for tpu_custom_call.1']
    #allocation5 [shape = 'u8[786432]{0}', space=vmem, size = 0xc0000, scoped, tag = 'input window, operand 1, single buffered']
    #allocation6 [shape = 's32[1]{0}', space=sflag, size = 0x4, scoped, tag = 'scoped memory for tpu_custom_call.1']
    #allocation7 [shape = 'u8[65536]{0}', space=vmem, size = 0x10000, scoped, tag = 'input window, operand 3, single buffered']
    #allocation8 [shape = 'u8[65536]{0}', space=vmem, size = 0x10000, scoped, tag = 'input window, operand 5, single buffered']
    #allocation9 [shape = 's32[1]{0}', space=sflag, size = 0x4, scoped, tag = 'scoped memory for tpu_custom_call.1']
    #allocation10 [shape = 'u8[8192]{0}', space=vmem, size = 0x2000, scoped, tag = 'output window, operand 0, single buffered']
    %12 = vsyncpa [#allocation3], 0
    %13 = vsyncpa [#allocation6], 0
    %14 = vsyncpa [#allocation9], 0
    %15 = vsyncpa [#allocation4], 0
    // Predicated region
    $region2: #{tpu_custom_call.1} parent=1 // pred_check
      _
    $region3: #{tpu_custom_call.1} parent=1 // pred_check_branch
      %17 = sbr.rel (0) target = $region5
    $region4: #{tpu_custom_call.1} parent=1 // pred_region
      %s19 = ssub.s32 3072, 3072
      %20 = vsyncadd [#allocation3], %s19
      %s21 = sshll.u32 [#allocation2], 4
      %s22 = int_to_ptr.vmem [resolvable:$true] %s21
      %27 = dma.hbm_to_vmem [thread:$0]  %s0, 3072, %s22, [#allocation3], 1536, 1536, 96
    $region5: #{tpu_custom_call.1} parent=1 // pred_fallthru
      _
    // Predicated region
    $region6: #{tpu_custom_call.1} parent=1 // pred_check
      _
    $region7: #{tpu_custom_call.1} parent=1 // pred_check_branch
      %29 = sbr.rel (0) target = $region9
    $region8: #{tpu_custom_call.1} parent=1 // pred_region
      %s31 = ssub.s32 24576, 24576
      %32 = vsyncadd [#allocation6], %s31
      %s33 = sshll.u32 [#allocation5], 4
      %s34 = int_to_ptr.vmem [resolvable:$true] %s33
      %39 = dma.hbm_to_vmem [thread:$0]  %s1, 24576, %s34, [#allocation6], 64, 64, 4
    $region9: #{tpu_custom_call.1} parent=1 // pred_fallthru
      _
    // Predicated region
    $region10: #{tpu_custom_call.1} parent=1 // pred_check
      _
    $region11: #{tpu_custom_call.1} parent=1 // pred_check_branch
      %41 = sbr.rel (0) target = $region13
    $region12: #{tpu_custom_call.1} parent=1 // pred_region
      _
    $region13: #{tpu_custom_call.1} parent=1 // pred_fallthru
      _
    // Predicated region
    $region14: #{tpu_custom_call.1} parent=1 // pred_check
      _
    $region15: #{tpu_custom_call.1} parent=1 // pred_check_branch
      %43 = sbr.rel (0) target = $region17
    $region16: #{tpu_custom_call.1} parent=1 // pred_region
      %s45 = ssub.s32 2048, 2048
      %46 = vsyncadd [#allocation6], %s45
      %s47 = sshll.u32 [#allocation7], 4
      %s48 = int_to_ptr.vmem [resolvable:$true] %s47
      %53 = dma.hbm_to_vmem [thread:$0]  %s3, 2048, %s48, [#allocation6], 128, 128, 8
    $region17: #{tpu_custom_call.1} parent=1 // pred_fallthru
      _
    // Predicated region
    $region18: #{tpu_custom_call.1} parent=1 // pred_check
      _
    $region19: #{tpu_custom_call.1} parent=1 // pred_check_branch
      %55 = sbr.rel (0) target = $region21
    $region20: #{tpu_custom_call.1} parent=1 // pred_region
      _
    $region21: #{tpu_custom_call.1} parent=1 // pred_fallthru
      _
    // Predicated region
    $region22: #{tpu_custom_call.1} parent=1 // pred_check
      _
    $region23: #{tpu_custom_call.1} parent=1 // pred_check_branch
      %57 = sbr.rel (0) target = $region25
    $region24: #{tpu_custom_call.1} parent=1 // pred_region
      %s59 = ssub.s32 2048, 2048
      %60 = vsyncadd [#allocation9], %s59
      %s61 = sshll.u32 [#allocation8], 4
      %s62 = int_to_ptr.vmem [resolvable:$true] %s61
      %67 = dma.hbm_to_vmem [thread:$0]  %s5, 2048, %s62, [#allocation9], 128, 128, 8
    $region25: #{tpu_custom_call.1} parent=1 // pred_fallthru
      _
    // Predicated region
    $region26: #{tpu_custom_call.1} parent=1 // pred_check
      _
    $region27: #{tpu_custom_call.1} parent=1 // pred_check_branch
      %69 = sbr.rel (0) target = $region29
    $region28: #{tpu_custom_call.1} parent=1 // pred_region
      _
    $region29: #{tpu_custom_call.1} parent=1 // pred_fallthru
      _
    // Predicated region
    $region30: #{tpu_custom_call.1} parent=1 // pred_check
      _
    $region31: #{tpu_custom_call.1} parent=1 // pred_check_branch
      %71 = sbr.rel (0) target = $region33
    $region32: #{tpu_custom_call.1} parent=1 // pred_region
      %72 = dma.done [#allocation3], 3072
    $region33: #{tpu_custom_call.1} parent=1 // pred_fallthru
      _
    // Predicated region
    $region34: #{tpu_custom_call.1} parent=1 // pred_check
      _
    $region35: #{tpu_custom_call.1} parent=1 // pred_check_branch
      %74 = sbr.rel (0) target = $region37
    $region36: #{tpu_custom_call.1} parent=1 // pred_region
      %75 = dma.done [#allocation6], 24576
    $region37: #{tpu_custom_call.1} parent=1 // pred_fallthru
      _
    // Predicated region
    $region38: #{tpu_custom_call.1} parent=1 // pred_check
      _
    $region39: #{tpu_custom_call.1} parent=1 // pred_check_branch
      %77 = sbr.rel (0) target = $region41
    $region40: #{tpu_custom_call.1} parent=1 // pred_region
      %78 = dma.done [#allocation6], 2048
    $region41: #{tpu_custom_call.1} parent=1 // pred_fallthru
      _
    // Predicated region
    $region42: #{tpu_custom_call.1} parent=1 // pred_check
      _
    $region43: #{tpu_custom_call.1} parent=1 // pred_check_branch
      %80 = sbr.rel (0) target = $region45
    $region44: #{tpu_custom_call.1} parent=1 // pred_region
      %81 = dma.done [#allocation9], 2048
    $region45: #{tpu_custom_call.1} parent=1 // pred_fallthru
      _
    %v83 = vld [vmem:[#allocation2] sm:$0xff]
    %v84 = vld [vmem:[#allocation2 + $0x8] sm:$0xff]
    %v85 = vld [vmem:[#allocation2 + $0x10] sm:$0xff]
    %v86 = vld [vmem:[#allocation2 + $0x18] sm:$0xff]
    %v87 = vld [vmem:[#allocation2 + $0x20] sm:$0xff]
    %v88 = vld [vmem:[#allocation2 + $0x28] sm:$0xff]
    %v89 = vld [vmem:[#allocation2 + $0x30] sm:$0xff]
    %v90 = vld [vmem:[#allocation2 + $0x38] sm:$0xff]
    %v91 = vld [vmem:[#allocation2 + $0x40] sm:$0xff]
    %v92 = vld [vmem:[#allocation2 + $0x48] sm:$0xff]
    %v93 = vld [vmem:[#allocation2 + $0x50] sm:$0xff]
    %v94 = vld [vmem:[#allocation2 + $0x58] sm:$0xff]
    %v95 = vld [vmem:[#allocation2 + $0x60] sm:$0xff]
    %v96 = vld [vmem:[#allocation2 + $0x68] sm:$0xff]
    %v97 = vld [vmem:[#allocation2 + $0x70] sm:$0xff]
    %v98 = vld [vmem:[#allocation2 + $0x78] sm:$0xff]
    %v99 = vld [vmem:[#allocation2 + $0x80] sm:$0xff]
    %v100 = vld [vmem:[#allocation2 + $0x88] sm:$0xff]
    %v101 = vld [vmem:[#allocation2 + $0x90] sm:$0xff]
    %v102 = vld [vmem:[#allocation2 + $0x98] sm:$0xff]
    %v103 = vld [vmem:[#allocation2 + $0xa0] sm:$0xff]
    %v104 = vld [vmem:[#allocation2 + $0xa8] sm:$0xff]
    %v105 = vld [vmem:[#allocation2 + $0xb0] sm:$0xff]
    %v106 = vld [vmem:[#allocation2 + $0xb8] sm:$0xff]
    %v107 = vld [vmem:[#allocation5] sm:$0xf]
    %v108 = vld [vmem:[#allocation5 + $0x4] sm:$0xf]
    %v109 = vld [vmem:[#allocation5 + $0x8] sm:$0xf]
    %v110 = vld [vmem:[#allocation5 + $0xc] sm:$0xf]
    %v111 = vld [vmem:[#allocation5 + $0x10] sm:$0xf]
    %v112 = vld [vmem:[#allocation5 + $0x14] sm:$0xf]
    %v113 = vld [vmem:[#allocation5 + $0x18] sm:$0xf]
    %v114 = vld [vmem:[#allocation5 + $0x1c] sm:$0xf]
    %v115 = vld [vmem:[#allocation5 + $0x20] sm:$0xf]
    %v116 = vld [vmem:[#allocation5 + $0x24] sm:$0xf]
    %v117 = vld [vmem:[#allocation5 + $0x28] sm:$0xf]
    %v118 = vld [vmem:[#allocation5 + $0x2c] sm:$0xf]
    %v119 = vld [vmem:[#allocation5 + $0x30] sm:$0xf]
    %v120 = vld [vmem:[#allocation5 + $0x34] sm:$0xf]
    %v121 = vld [vmem:[#allocation5 + $0x38] sm:$0xf]
    %v122 = vld [vmem:[#allocation5 + $0x3c] sm:$0xf]
    %v123 = vld [vmem:[#allocation5 + $0x40] sm:$0xf]
    %v124 = vld [vmem:[#allocation5 + $0x44] sm:$0xf]
    %v125 = vld [vmem:[#allocation5 + $0x48] sm:$0xf]
    %v126 = vld [vmem:[#allocation5 + $0x4c] sm:$0xf]
    %v127 = vld [vmem:[#allocation5 + $0x50] sm:$0xf]
    %v128 = vld [vmem:[#allocation5 + $0x54] sm:$0xf]
    %v129 = vld [vmem:[#allocation5 + $0x58] sm:$0xf]
    %v130 = vld [vmem:[#allocation5 + $0x5c] sm:$0xf]
    %v131 = vld [vmem:[#allocation5 + $0x60] sm:$0xf]
    %v132 = vld [vmem:[#allocation5 + $0x64] sm:$0xf]
    %v133 = vld [vmem:[#allocation5 + $0x68] sm:$0xf]
    %v134 = vld [vmem:[#allocation5 + $0x6c] sm:$0xf]
    %v135 = vld [vmem:[#allocation5 + $0x70] sm:$0xf]
    %v136 = vld [vmem:[#allocation5 + $0x74] sm:$0xf]
    %v137 = vld [vmem:[#allocation5 + $0x78] sm:$0xf]
    %v138 = vld [vmem:[#allocation5 + $0x7c] sm:$0xf]
    %v139 = vld [vmem:[#allocation5 + $0x80] sm:$0xf]
    %v140 = vld [vmem:[#allocation5 + $0x84] sm:$0xf]
    %v141 = vld [vmem:[#allocation5 + $0x88] sm:$0xf]
    %v142 = vld [vmem:[#allocation5 + $0x8c] sm:$0xf]
    %v143 = vld [vmem:[#allocation5 + $0x90] sm:$0xf]
    %v144 = vld [vmem:[#allocation5 + $0x94] sm:$0xf]
    %v145 = vld [vmem:[#allocation5 + $0x98] sm:$0xf]
    %v146 = vld [vmem:[#allocation5 + $0x9c] sm:$0xf]
    %v147 = vld [vmem:[#allocation5 + $0xa0] sm:$0xf]
    %v148 = vld [vmem:[#allocation5 + $0xa4] sm:$0xf]
    %v149 = vld [vmem:[#allocation5 + $0xa8] sm:$0xf]
    %v150 = vld [vmem:[#allocation5 + $0xac] sm:$0xf]
    %v151 = vld [vmem:[#allocation5 + $0xb0] sm:$0xf]
    %v152 = vld [vmem:[#allocation5 + $0xb4] sm:$0xf]
    %v153 = vld [vmem:[#allocation5 + $0xb8] sm:$0xf]
    %v154 = vld [vmem:[#allocation5 + $0xbc] sm:$0xf]
    %v155 = vld [vmem:[#allocation5 + $0xc0] sm:$0xf]
    %v156 = vld [vmem:[#allocation5 + $0xc4] sm:$0xf]
    %v157 = vld [vmem:[#allocation5 + $0xc8] sm:$0xf]
    %v158 = vld [vmem:[#allocation5 + $0xcc] sm:$0xf]
    %v159 = vld [vmem:[#allocation5 + $0xd0] sm:$0xf]
    %v160 = vld [vmem:[#allocation5 + $0xd4] sm:$0xf]
    %v161 = vld [vmem:[#allocation5 + $0xd8] sm:$0xf]
    %v162 = vld [vmem:[#allocation5 + $0xdc] sm:$0xf]
    %v163 = vld [vmem:[#allocation5 + $0xe0] sm:$0xf]
    %v164 = vld [vmem:[#allocation5 + $0xe4] sm:$0xf]
    %v165 = vld [vmem:[#allocation5 + $0xe8] sm:$0xf]
    %v166 = vld [vmem:[#allocation5 + $0xec] sm:$0xf]
    %v167 = vld [vmem:[#allocation5 + $0xf0] sm:$0xf]
    %v168 = vld [vmem:[#allocation5 + $0xf4] sm:$0xf]
    %v169 = vld [vmem:[#allocation5 + $0xf8] sm:$0xf]
    %v170 = vld [vmem:[#allocation5 + $0xfc] sm:$0xf]
    %v171 = vld [vmem:[#allocation5 + $0x100] sm:$0xf]
    %v172 = vld [vmem:[#allocation5 + $0x104] sm:$0xf]
    %v173 = vld [vmem:[#allocation5 + $0x108] sm:$0xf]
    %v174 = vld [vmem:[#allocation5 + $0x10c] sm:$0xf]
    %v175 = vld [vmem:[#allocation5 + $0x110] sm:$0xf]
    %v176 = vld [vmem:[#allocation5 + $0x114] sm:$0xf]
    %v177 = vld [vmem:[#allocation5 + $0x118] sm:$0xf]
    %v178 = vld [vmem:[#allocation5 + $0x11c] sm:$0xf]
    %v179 = vld [vmem:[#allocation5 + $0x120] sm:$0xf]
    %v180 = vld [vmem:[#allocation5 + $0x124] sm:$0xf]
    %v181 = vld [vmem:[#allocation5 + $0x128] sm:$0xf]
    %v182 = vld [vmem:[#allocation5 + $0x12c] sm:$0xf]
    %v183 = vld [vmem:[#allocation5 + $0x130] sm:$0xf]
    %v184 = vld [vmem:[#allocation5 + $0x134] sm:$0xf]
    %v185 = vld [vmem:[#allocation5 + $0x138] sm:$0xf]
    %v186 = vld [vmem:[#allocation5 + $0x13c] sm:$0xf]
    %v187 = vld [vmem:[#allocation5 + $0x140] sm:$0xf]
    %v188 = vld [vmem:[#allocation5 + $0x144] sm:$0xf]
    %v189 = vld [vmem:[#allocation5 + $0x148] sm:$0xf]
    %v190 = vld [vmem:[#allocation5 + $0x14c] sm:$0xf]
    %v191 = vld [vmem:[#allocation5 + $0x150] sm:$0xf]
    %v192 = vld [vmem:[#allocation5 + $0x154] sm:$0xf]
    %v193 = vld [vmem:[#allocation5 + $0x158] sm:$0xf]
    %v194 = vld [vmem:[#allocation5 + $0x15c] sm:$0xf]
    %v195 = vld [vmem:[#allocation5 + $0x160] sm:$0xf]
    %v196 = vld [vmem:[#allocation5 + $0x164] sm:$0xf]
    %v197 = vld [vmem:[#allocation5 + $0x168] sm:$0xf]
    %v198 = vld [vmem:[#allocation5 + $0x16c] sm:$0xf]
    %v199 = vld [vmem:[#allocation5 + $0x170] sm:$0xf]
    %v200 = vld [vmem:[#allocation5 + $0x174] sm:$0xf]
    %v201 = vld [vmem:[#allocation5 + $0x178] sm:$0xf]
    %v202 = vld [vmem:[#allocation5 + $0x17c] sm:$0xf]
    %v203 = vld [vmem:[#allocation5 + $0x180] sm:$0xf]
    %v204 = vld [vmem:[#allocation5 + $0x184] sm:$0xf]
    %v205 = vld [vmem:[#allocation5 + $0x188] sm:$0xf]
    %v206 = vld [vmem:[#allocation5 + $0x18c] sm:$0xf]
    %v207 = vld [vmem:[#allocation5 + $0x190] sm:$0xf]
    %v208 = vld [vmem:[#allocation5 + $0x194] sm:$0xf]
    %v209 = vld [vmem:[#allocation5 + $0x198] sm:$0xf]
    %v210 = vld [vmem:[#allocation5 + $0x19c] sm:$0xf]
    %v211 = vld [vmem:[#allocation5 + $0x1a0] sm:$0xf]
    %v212 = vld [vmem:[#allocation5 + $0x1a4] sm:$0xf]
    %v213 = vld [vmem:[#allocation5 + $0x1a8] sm:$0xf]
    %v214 = vld [vmem:[#allocation5 + $0x1ac] sm:$0xf]
    %v215 = vld [vmem:[#allocation5 + $0x1b0] sm:$0xf]
    %v216 = vld [vmem:[#allocation5 + $0x1b4] sm:$0xf]
    %v217 = vld [vmem:[#allocation5 + $0x1b8] sm:$0xf]
    %v218 = vld [vmem:[#allocation5 + $0x1bc] sm:$0xf]
    %v219 = vld [vmem:[#allocation5 + $0x1c0] sm:$0xf]
    %v220 = vld [vmem:[#allocation5 + $0x1c4] sm:$0xf]
    %v221 = vld [vmem:[#allocation5 + $0x1c8] sm:$0xf]
    %v222 = vld [vmem:[#allocation5 + $0x1cc] sm:$0xf]
    %v223 = vld [vmem:[#allocation5 + $0x1d0] sm:$0xf]
    %v224 = vld [vmem:[#allocation5 + $0x1d4] sm:$0xf]
    %v225 = vld [vmem:[#allocation5 + $0x1d8] sm:$0xf]
    %v226 = vld [vmem:[#allocation5 + $0x1dc] sm:$0xf]
    %v227 = vld [vmem:[#allocation5 + $0x1e0] sm:$0xf]
    %v228 = vld [vmem:[#allocation5 + $0x1e4] sm:$0xf]
    %v229 = vld [vmem:[#allocation5 + $0x1e8] sm:$0xf]
    %v230 = vld [vmem:[#allocation5 + $0x1ec] sm:$0xf]
    %v231 = vld [vmem:[#allocation5 + $0x1f0] sm:$0xf]
    %v232 = vld [vmem:[#allocation5 + $0x1f4] sm:$0xf]
    %v233 = vld [vmem:[#allocation5 + $0x1f8] sm:$0xf]
    %v234 = vld [vmem:[#allocation5 + $0x1fc] sm:$0xf]
    %v235 = vld [vmem:[#allocation5 + $0x200] sm:$0xf]
    %v236 = vld [vmem:[#allocation5 + $0x204] sm:$0xf]
    %v237 = vld [vmem:[#allocation5 + $0x208] sm:$0xf]
    %v238 = vld [vmem:[#allocation5 + $0x20c] sm:$0xf]
    %v239 = vld [vmem:[#allocation5 + $0x210] sm:$0xf]
    %v240 = vld [vmem:[#allocation5 + $0x214] sm:$0xf]
    %v241 = vld [vmem:[#allocation5 + $0x218] sm:$0xf]
    %v242 = vld [vmem:[#allocation5 + $0x21c] sm:$0xf]
    %v243 = vld [vmem:[#allocation5 + $0x220] sm:$0xf]
    %v244 = vld [vmem:[#allocation5 + $0x224] sm:$0xf]
    %v245 = vld [vmem:[#allocation5 + $0x228] sm:$0xf]
    %v246 = vld [vmem:[#allocation5 + $0x22c] sm:$0xf]
    %v247 = vld [vmem:[#allocation5 + $0x230] sm:$0xf]
    %v248 = vld [vmem:[#allocation5 + $0x234] sm:$0xf]
    %v249 = vld [vmem:[#allocation5 + $0x238] sm:$0xf]
    %v250 = vld [vmem:[#allocation5 + $0x23c] sm:$0xf]
    %v251 = vld [vmem:[#allocation5 + $0x240] sm:$0xf]
    %v252 = vld [vmem:[#allocation5 + $0x244] sm:$0xf]
    %v253 = vld [vmem:[#allocation5 + $0x248] sm:$0xf]
    %v254 = vld [vmem:[#allocation5 + $0x24c] sm:$0xf]
    %v255 = vld [vmem:[#allocation5 + $0x250] sm:$0xf]
    %v256 = vld [vmem:[#allocation5 + $0x254] sm:$0xf]
    %v257 = vld [vmem:[#allocation5 + $0x258] sm:$0xf]
    %v258 = vld [vmem:[#allocation5 + $0x25c] sm:$0xf]
    %v259 = vld [vmem:[#allocation5 + $0x260] sm:$0xf]
    %v260 = vld [vmem:[#allocation5 + $0x264] sm:$0xf]
    %v261 = vld [vmem:[#allocation5 + $0x268] sm:$0xf]
    %v262 = vld [vmem:[#allocation5 + $0x26c] sm:$0xf]
    %v263 = vld [vmem:[#allocation5 + $0x270] sm:$0xf]
    %v264 = vld [vmem:[#allocation5 + $0x274] sm:$0xf]
    %v265 = vld [vmem:[#allocation5 + $0x278] sm:$0xf]
    %v266 = vld [vmem:[#allocation5 + $0x27c] sm:$0xf]
    %v267 = vld [vmem:[#allocation5 + $0x280] sm:$0xf]
    %v268 = vld [vmem:[#allocation5 + $0x284] sm:$0xf]
    %v269 = vld [vmem:[#allocation5 + $0x288] sm:$0xf]
    %v270 = vld [vmem:[#allocation5 + $0x28c] sm:$0xf]
    %v271 = vld [vmem:[#allocation5 + $0x290] sm:$0xf]
    %v272 = vld [vmem:[#allocation5 + $0x294] sm:$0xf]
    %v273 = vld [vmem:[#allocation5 + $0x298] sm:$0xf]
    %v274 = vld [vmem:[#allocation5 + $0x29c] sm:$0xf]
    %v275 = vld [vmem:[#allocation5 + $0x2a0] sm:$0xf]
    %v276 = vld [vmem:[#allocation5 + $0x2a4] sm:$0xf]
    %v277 = vld [vmem:[#allocation5 + $0x2a8] sm:$0xf]
    %v278 = vld [vmem:[#allocation5 + $0x2ac] sm:$0xf]
    %v279 = vld [vmem:[#allocation5 + $0x2b0] sm:$0xf]
    %v280 = vld [vmem:[#allocation5 + $0x2b4] sm:$0xf]
    %v281 = vld [vmem:[#allocation5 + $0x2b8] sm:$0xf]
    %v282 = vld [vmem:[#allocation5 + $0x2bc] sm:$0xf]
    %v283 = vld [vmem:[#allocation5 + $0x2c0] sm:$0xf]
    %v284 = vld [vmem:[#allocation5 + $0x2c4] sm:$0xf]
    %v285 = vld [vmem:[#allocation5 + $0x2c8] sm:$0xf]
    %v286 = vld [vmem:[#allocation5 + $0x2cc] sm:$0xf]
    %v287 = vld [vmem:[#allocation5 + $0x2d0] sm:$0xf]
    %v288 = vld [vmem:[#allocation5 + $0x2d4] sm:$0xf]
    %v289 = vld [vmem:[#allocation5 + $0x2d8] sm:$0xf]
    %v290 = vld [vmem:[#allocation5 + $0x2dc] sm:$0xf]
    %v291 = vld [vmem:[#allocation5 + $0x2e0] sm:$0xf]
    %v292 = vld [vmem:[#allocation5 + $0x2e4] sm:$0xf]
    %v293 = vld [vmem:[#allocation5 + $0x2e8] sm:$0xf]
    %v294 = vld [vmem:[#allocation5 + $0x2ec] sm:$0xf]
    %v295 = vld [vmem:[#allocation5 + $0x2f0] sm:$0xf]
    %v296 = vld [vmem:[#allocation5 + $0x2f4] sm:$0xf]
    %v297 = vld [vmem:[#allocation5 + $0x2f8] sm:$0xf]
    %v298 = vld [vmem:[#allocation5 + $0x2fc] sm:$0xf]
    %v299 = vld [vmem:[#allocation5 + $0x300] sm:$0xf]
    %v300 = vld [vmem:[#allocation5 + $0x304] sm:$0xf]
    %v301 = vld [vmem:[#allocation5 + $0x308] sm:$0xf]
    %v302 = vld [vmem:[#allocation5 + $0x30c] sm:$0xf]
    %v303 = vld [vmem:[#allocation5 + $0x310] sm:$0xf]
    %v304 = vld [vmem:[#allocation5 + $0x314] sm:$0xf]
    %v305 = vld [vmem:[#allocation5 + $0x318] sm:$0xf]
    %v306 = vld [vmem:[#allocation5 + $0x31c] sm:$0xf]
    %v307 = vld [vmem:[#allocation5 + $0x320] sm:$0xf]
    %v308 = vld [vmem:[#allocation5 + $0x324] sm:$0xf]
    %v309 = vld [vmem:[#allocation5 + $0x328] sm:$0xf]
    %v310 = vld [vmem:[#allocation5 + $0x32c] sm:$0xf]
    %v311 = vld [vmem:[#allocation5 + $0x330] sm:$0xf]
    %v312 = vld [vmem:[#allocation5 + $0x334] sm:$0xf]
    %v313 = vld [vmem:[#allocation5 + $0x338] sm:$0xf]
    %v314 = vld [vmem:[#allocation5 + $0x33c] sm:$0xf]
    %v315 = vld [vmem:[#allocation5 + $0x340] sm:$0xf]
    %v316 = vld [vmem:[#allocation5 + $0x344] sm:$0xf]
    %v317 = vld [vmem:[#allocation5 + $0x348] sm:$0xf]
    %v318 = vld [vmem:[#allocation5 + $0x34c] sm:$0xf]
    %v319 = vld [vmem:[#allocation5 + $0x350] sm:$0xf]
    %v320 = vld [vmem:[#allocation5 + $0x354] sm:$0xf]
    %v321 = vld [vmem:[#allocation5 + $0x358] sm:$0xf]
    %v322 = vld [vmem:[#allocation5 + $0x35c] sm:$0xf]
    %v323 = vld [vmem:[#allocation5 + $0x360] sm:$0xf]
    %v324 = vld [vmem:[#allocation5 + $0x364] sm:$0xf]
    %v325 = vld [vmem:[#allocation5 + $0x368] sm:$0xf]
    %v326 = vld [vmem:[#allocation5 + $0x36c] sm:$0xf]
    %v327 = vld [vmem:[#allocation5 + $0x370] sm:$0xf]
    %v328 = vld [vmem:[#allocation5 + $0x374] sm:$0xf]
    %v329 = vld [vmem:[#allocation5 + $0x378] sm:$0xf]
    %v330 = vld [vmem:[#allocation5 + $0x37c] sm:$0xf]
    %v331 = vld [vmem:[#allocation5 + $0x380] sm:$0xf]
    %v332 = vld [vmem:[#allocation5 + $0x384] sm:$0xf]
    %v333 = vld [vmem:[#allocation5 + $0x388] sm:$0xf]
    %v334 = vld [vmem:[#allocation5 + $0x38c] sm:$0xf]
    %v335 = vld [vmem:[#allocation5 + $0x390] sm:$0xf]
    %v336 = vld [vmem:[#allocation5 + $0x394] sm:$0xf]
    %v337 = vld [vmem:[#allocation5 + $0x398] sm:$0xf]
    %v338 = vld [vmem:[#allocation5 + $0x39c] sm:$0xf]
    %v339 = vld [vmem:[#allocation5 + $0x3a0] sm:$0xf]
    %v340 = vld [vmem:[#allocation5 + $0x3a4] sm:$0xf]
    %v341 = vld [vmem:[#allocation5 + $0x3a8] sm:$0xf]
    %v342 = vld [vmem:[#allocation5 + $0x3ac] sm:$0xf]
    %v343 = vld [vmem:[#allocation5 + $0x3b0] sm:$0xf]
    %v344 = vld [vmem:[#allocation5 + $0x3b4] sm:$0xf]
    %v345 = vld [vmem:[#allocation5 + $0x3b8] sm:$0xf]
    %v346 = vld [vmem:[#allocation5 + $0x3bc] sm:$0xf]
    %v347 = vld [vmem:[#allocation5 + $0x3c0] sm:$0xf]
    %v348 = vld [vmem:[#allocation5 + $0x3c4] sm:$0xf]
    %v349 = vld [vmem:[#allocation5 + $0x3c8] sm:$0xf]
    %v350 = vld [vmem:[#allocation5 + $0x3cc] sm:$0xf]
    %v351 = vld [vmem:[#allocation5 + $0x3d0] sm:$0xf]
    %v352 = vld [vmem:[#allocation5 + $0x3d4] sm:$0xf]
    %v353 = vld [vmem:[#allocation5 + $0x3d8] sm:$0xf]
    %v354 = vld [vmem:[#allocation5 + $0x3dc] sm:$0xf]
    %v355 = vld [vmem:[#allocation5 + $0x3e0] sm:$0xf]
    %v356 = vld [vmem:[#allocation5 + $0x3e4] sm:$0xf]
    %v357 = vld [vmem:[#allocation5 + $0x3e8] sm:$0xf]
    %v358 = vld [vmem:[#allocation5 + $0x3ec] sm:$0xf]
    %v359 = vld [vmem:[#allocation5 + $0x3f0] sm:$0xf]
    %v360 = vld [vmem:[#allocation5 + $0x3f4] sm:$0xf]
    %v361 = vld [vmem:[#allocation5 + $0x3f8] sm:$0xf]
    %v362 = vld [vmem:[#allocation5 + $0x3fc] sm:$0xf]
    %v363 = vld [vmem:[#allocation5 + $0x400] sm:$0xf]
    %v364 = vld [vmem:[#allocation5 + $0x404] sm:$0xf]
    %v365 = vld [vmem:[#allocation5 + $0x408] sm:$0xf]
    %v366 = vld [vmem:[#allocation5 + $0x40c] sm:$0xf]
    %v367 = vld [vmem:[#allocation5 + $0x410] sm:$0xf]
    %v368 = vld [vmem:[#allocation5 + $0x414] sm:$0xf]
    %v369 = vld [vmem:[#allocation5 + $0x418] sm:$0xf]
    %v370 = vld [vmem:[#allocation5 + $0x41c] sm:$0xf]
    %v371 = vld [vmem:[#allocation5 + $0x420] sm:$0xf]
    %v372 = vld [vmem:[#allocation5 + $0x424] sm:$0xf]
    %v373 = vld [vmem:[#allocation5 + $0x428] sm:$0xf]
    %v374 = vld [vmem:[#allocation5 + $0x42c] sm:$0xf]
    %v375 = vld [vmem:[#allocation5 + $0x430] sm:$0xf]
    %v376 = vld [vmem:[#allocation5 + $0x434] sm:$0xf]
    %v377 = vld [vmem:[#allocation5 + $0x438] sm:$0xf]
    %v378 = vld [vmem:[#allocation5 + $0x43c] sm:$0xf]
    %v379 = vld [vmem:[#allocation5 + $0x440] sm:$0xf]
    %v380 = vld [vmem:[#allocation5 + $0x444] sm:$0xf]
    %v381 = vld [vmem:[#allocation5 + $0x448] sm:$0xf]
    %v382 = vld [vmem:[#allocation5 + $0x44c] sm:$0xf]
    %v383 = vld [vmem:[#allocation5 + $0x450] sm:$0xf]
    %v384 = vld [vmem:[#allocation5 + $0x454] sm:$0xf]
    %v385 = vld [vmem:[#allocation5 + $0x458] sm:$0xf]
    %v386 = vld [vmem:[#allocation5 + $0x45c] sm:$0xf]
    %v387 = vld [vmem:[#allocation5 + $0x460] sm:$0xf]
    %v388 = vld [vmem:[#allocation5 + $0x464] sm:$0xf]
    %v389 = vld [vmem:[#allocation5 + $0x468] sm:$0xf]
    %v390 = vld [vmem:[#allocation5 + $0x46c] sm:$0xf]
    %v391 = vld [vmem:[#allocation5 + $0x470] sm:$0xf]
    %v392 = vld [vmem:[#allocation5 + $0x474] sm:$0xf]
    %v393 = vld [vmem:[#allocation5 + $0x478] sm:$0xf]
    %v394 = vld [vmem:[#allocation5 + $0x47c] sm:$0xf]
    %v395 = vld [vmem:[#allocation5 + $0x480] sm:$0xf]
    %v396 = vld [vmem:[#allocation5 + $0x484] sm:$0xf]
    %v397 = vld [vmem:[#allocation5 + $0x488] sm:$0xf]
    %v398 = vld [vmem:[#allocation5 + $0x48c] sm:$0xf]
    %v399 = vld [vmem:[#allocation5 + $0x490] sm:$0xf]
    %v400 = vld [vmem:[#allocation5 + $0x494] sm:$0xf]
    %v401 = vld [vmem:[#allocation5 + $0x498] sm:$0xf]
    %v402 = vld [vmem:[#allocation5 + $0x49c] sm:$0xf]
    %v403 = vld [vmem:[#allocation5 + $0x4a0] sm:$0xf]
    %v404 = vld [vmem:[#allocation5 + $0x4a4] sm:$0xf]
    %v405 = vld [vmem:[#allocation5 + $0x4a8] sm:$0xf]
    %v406 = vld [vmem:[#allocation5 + $0x4ac] sm:$0xf]
    %v407 = vld [vmem:[#allocation5 + $0x4b0] sm:$0xf]
    %v408 = vld [vmem:[#allocation5 + $0x4b4] sm:$0xf]
    %v409 = vld [vmem:[#allocation5 + $0x4b8] sm:$0xf]
    %v410 = vld [vmem:[#allocation5 + $0x4bc] sm:$0xf]
    %v411 = vld [vmem:[#allocation5 + $0x4c0] sm:$0xf]
    %v412 = vld [vmem:[#allocation5 + $0x4c4] sm:$0xf]
    %v413 = vld [vmem:[#allocation5 + $0x4c8] sm:$0xf]
    %v414 = vld [vmem:[#allocation5 + $0x4cc] sm:$0xf]
    %v415 = vld [vmem:[#allocation5 + $0x4d0] sm:$0xf]
    %v416 = vld [vmem:[#allocation5 + $0x4d4] sm:$0xf]
    %v417 = vld [vmem:[#allocation5 + $0x4d8] sm:$0xf]
    %v418 = vld [vmem:[#allocation5 + $0x4dc] sm:$0xf]
    %v419 = vld [vmem:[#allocation5 + $0x4e0] sm:$0xf]
    %v420 = vld [vmem:[#allocation5 + $0x4e4] sm:$0xf]
    %v421 = vld [vmem:[#allocation5 + $0x4e8] sm:$0xf]
    %v422 = vld [vmem:[#allocation5 + $0x4ec] sm:$0xf]
    %v423 = vld [vmem:[#allocation5 + $0x4f0] sm:$0xf]
    %v424 = vld [vmem:[#allocation5 + $0x4f4] sm:$0xf]
    %v425 = vld [vmem:[#allocation5 + $0x4f8] sm:$0xf]
    %v426 = vld [vmem:[#allocation5 + $0x4fc] sm:$0xf]
    %v427 = vld [vmem:[#allocation5 + $0x500] sm:$0xf]
    %v428 = vld [vmem:[#allocation5 + $0x504] sm:$0xf]
    %v429 = vld [vmem:[#allocation5 + $0x508] sm:$0xf]
    %v430 = vld [vmem:[#allocation5 + $0x50c] sm:$0xf]
    %v431 = vld [vmem:[#allocation5 + $0x510] sm:$0xf]
    %v432 = vld [vmem:[#allocation5 + $0x514] sm:$0xf]
    %v433 = vld [vmem:[#allocation5 + $0x518] sm:$0xf]
    %v434 = vld [vmem:[#allocation5 + $0x51c] sm:$0xf]
    %v435 = vld [vmem:[#allocation5 + $0x520] sm:$0xf]
    %v436 = vld [vmem:[#allocation5 + $0x524] sm:$0xf]
    %v437 = vld [vmem:[#allocation5 + $0x528] sm:$0xf]
    %v438 = vld [vmem:[#allocation5 + $0x52c] sm:$0xf]
    %v439 = vld [vmem:[#allocation5 + $0x530] sm:$0xf]
    %v440 = vld [vmem:[#allocation5 + $0x534] sm:$0xf]
    %v441 = vld [vmem:[#allocation5 + $0x538] sm:$0xf]
    %v442 = vld [vmem:[#allocation5 + $0x53c] sm:$0xf]
    %v443 = vld [vmem:[#allocation5 + $0x540] sm:$0xf]
    %v444 = vld [vmem:[#allocation5 + $0x544] sm:$0xf]
    %v445 = vld [vmem:[#allocation5 + $0x548] sm:$0xf]
    %v446 = vld [vmem:[#allocation5 + $0x54c] sm:$0xf]
    %v447 = vld [vmem:[#allocation5 + $0x550] sm:$0xf]
    %v448 = vld [vmem:[#allocation5 + $0x554] sm:$0xf]
    %v449 = vld [vmem:[#allocation5 + $0x558] sm:$0xf]
    %v450 = vld [vmem:[#allocation5 + $0x55c] sm:$0xf]
    %v451 = vld [vmem:[#allocation5 + $0x560] sm:$0xf]
    %v452 = vld [vmem:[#allocation5 + $0x564] sm:$0xf]
    %v453 = vld [vmem:[#allocation5 + $0x568] sm:$0xf]
    %v454 = vld [vmem:[#allocation5 + $0x56c] sm:$0xf]
    %v455 = vld [vmem:[#allocation5 + $0x570] sm:$0xf]
    %v456 = vld [vmem:[#allocation5 + $0x574] sm:$0xf]
    %v457 = vld [vmem:[#allocation5 + $0x578] sm:$0xf]
    %v458 = vld [vmem:[#allocation5 + $0x57c] sm:$0xf]
    %v459 = vld [vmem:[#allocation5 + $0x580] sm:$0xf]
    %v460 = vld [vmem:[#allocation5 + $0x584] sm:$0xf]
    %v461 = vld [vmem:[#allocation5 + $0x588] sm:$0xf]
    %v462 = vld [vmem:[#allocation5 + $0x58c] sm:$0xf]
    %v463 = vld [vmem:[#allocation5 + $0x590] sm:$0xf]
    %v464 = vld [vmem:[#allocation5 + $0x594] sm:$0xf]
    %v465 = vld [vmem:[#allocation5 + $0x598] sm:$0xf]
    %v466 = vld [vmem:[#allocation5 + $0x59c] sm:$0xf]
    %v467 = vld [vmem:[#allocation5 + $0x5a0] sm:$0xf]
    %v468 = vld [vmem:[#allocation5 + $0x5a4] sm:$0xf]
    %v469 = vld [vmem:[#allocation5 + $0x5a8] sm:$0xf]
    %v470 = vld [vmem:[#allocation5 + $0x5ac] sm:$0xf]
    %v471 = vld [vmem:[#allocation5 + $0x5b0] sm:$0xf]
    %v472 = vld [vmem:[#allocation5 + $0x5b4] sm:$0xf]
    %v473 = vld [vmem:[#allocation5 + $0x5b8] sm:$0xf]
    %v474 = vld [vmem:[#allocation5 + $0x5bc] sm:$0xf]
    %v475 = vld [vmem:[#allocation5 + $0x5c0] sm:$0xf]
    %v476 = vld [vmem:[#allocation5 + $0x5c4] sm:$0xf]
    %v477 = vld [vmem:[#allocation5 + $0x5c8] sm:$0xf]
    %v478 = vld [vmem:[#allocation5 + $0x5cc] sm:$0xf]
    %v479 = vld [vmem:[#allocation5 + $0x5d0] sm:$0xf]
    %v480 = vld [vmem:[#allocation5 + $0x5d4] sm:$0xf]
    %v481 = vld [vmem:[#allocation5 + $0x5d8] sm:$0xf]
    %v482 = vld [vmem:[#allocation5 + $0x5dc] sm:$0xf]
    %v483 = vld [vmem:[#allocation5 + $0x5e0] sm:$0xf]
    %v484 = vld [vmem:[#allocation5 + $0x5e4] sm:$0xf]
    %v485 = vld [vmem:[#allocation5 + $0x5e8] sm:$0xf]
    %v486 = vld [vmem:[#allocation5 + $0x5ec] sm:$0xf]
    %v487 = vld [vmem:[#allocation5 + $0x5f0] sm:$0xf]
    %v488 = vld [vmem:[#allocation5 + $0x5f4] sm:$0xf]
    %v489 = vld [vmem:[#allocation5 + $0x5f8] sm:$0xf]
    %v490 = vld [vmem:[#allocation5 + $0x5fc] sm:$0xf]
    %v491 = vld [vmem:[%s2] sm:$0x1]
    %v493 = vlaneseq
    %v494 = vshrl.u32 %v493, 7
    %v495 = vsub.s32 0, %v494
    %v496 = vrot.slane %v491, %v495
    %v522 = vunpack.c.l.b16 %v83
    %v523 = vunpack.c.h.b16 %v83
    %v524 = vunpack.c.l.b16 %v84
    %v525 = vunpack.c.h.b16 %v84
    %v526 = vunpack.c.l.b16 %v85
    %v527 = vunpack.c.h.b16 %v85
    %v528 = vunpack.c.l.b16 %v86
    %v529 = vunpack.c.h.b16 %v86
    %v530 = vunpack.c.l.b16 %v87
    %v531 = vunpack.c.h.b16 %v87
    %v532 = vunpack.c.l.b16 %v88
    %v533 = vunpack.c.h.b16 %v88
    %v534 = vunpack.c.l.b16 %v89
    %v535 = vunpack.c.h.b16 %v89
    %v536 = vunpack.c.l.b16 %v90
    %v537 = vunpack.c.h.b16 %v90
    %v538 = vunpack.c.l.b16 %v91
    %v539 = vunpack.c.h.b16 %v91
    %v540 = vunpack.c.l.b16 %v92
    %v541 = vunpack.c.h.b16 %v92
    %v542 = vunpack.c.l.b16 %v93
    %v543 = vunpack.c.h.b16 %v93
    %v544 = vunpack.c.l.b16 %v94
    %v545 = vunpack.c.h.b16 %v94
    %v546 = vunpack.c.l.b16 %v95
    %v547 = vunpack.c.h.b16 %v95
    %v548 = vunpack.c.l.b16 %v96
    %v549 = vunpack.c.h.b16 %v96
    %v550 = vunpack.c.l.b16 %v97
    %v551 = vunpack.c.h.b16 %v97
    %v552 = vunpack.c.l.b16 %v98
    %v553 = vunpack.c.h.b16 %v98
    %v554 = vunpack.c.l.b16 %v99
    %v555 = vunpack.c.h.b16 %v99
    %v556 = vunpack.c.l.b16 %v100
    %v557 = vunpack.c.h.b16 %v100
    %v558 = vunpack.c.l.b16 %v101
    %v559 = vunpack.c.h.b16 %v101
    %v560 = vunpack.c.l.b16 %v102
    %v561 = vunpack.c.h.b16 %v102
    %v562 = vunpack.c.l.b16 %v103
    %v563 = vunpack.c.h.b16 %v103
    %v564 = vunpack.c.l.b16 %v104
    %v565 = vunpack.c.h.b16 %v104
    %v566 = vunpack.c.l.b16 %v105
    %v567 = vunpack.c.h.b16 %v105
    %v568 = vunpack.c.l.b16 %v106
    %v569 = vunpack.c.h.b16 %v106
    %v570 = vpack.c.b16 %v546, %v522
    %v571 = vpack.c.b16 %v547, %v523
    %v572 = vpack.c.b16 %v548, %v524
    %v573 = vpack.c.b16 %v549, %v525
    %v574 = vpack.c.b16 %v550, %v526
    %v575 = vpack.c.b16 %v551, %v527
    %v576 = vpack.c.b16 %v552, %v528
    %v577 = vpack.c.b16 %v553, %v529
    %v578 = vpack.c.b16 %v554, %v530
    %v579 = vpack.c.b16 %v555, %v531
    %v580 = vpack.c.b16 %v556, %v532
    %v581 = vpack.c.b16 %v557, %v533
    %v582 = vpack.c.b16 %v558, %v534
    %v583 = vpack.c.b16 %v559, %v535
    %v584 = vpack.c.b16 %v560, %v536
    %v585 = vpack.c.b16 %v561, %v537
    %v586 = vpack.c.b16 %v562, %v538
    %v587 = vpack.c.b16 %v563, %v539
    %v588 = vpack.c.b16 %v564, %v540
    %v589 = vpack.c.b16 %v565, %v541
    %v590 = vpack.c.b16 %v566, %v542
    %v591 = vpack.c.b16 %v567, %v543
    %v592 = vpack.c.b16 %v568, %v544
    %v593 = vpack.c.b16 %v569, %v545
    %v1002 = vunpack.c.l.b16 %v107
    %v1003 = vunpack.c.l.b16 %v108
    %v1004 = vunpack.c.l.b16 %v109
    %v1005 = vunpack.c.l.b16 %v110
    %v1006 = vunpack.c.l.b16 %v111
    %v1007 = vunpack.c.l.b16 %v112
    %v1008 = vunpack.c.l.b16 %v113
    %v1009 = vunpack.c.l.b16 %v114
    %v1010 = vunpack.c.l.b16 %v115
    %v1011 = vunpack.c.l.b16 %v116
    %v1012 = vunpack.c.l.b16 %v117
    %v1013 = vunpack.c.l.b16 %v118
    %v1014 = vunpack.c.l.b16 %v119
    %v1015 = vunpack.c.l.b16 %v120
    %v1016 = vunpack.c.l.b16 %v121
    %v1017 = vunpack.c.l.b16 %v122
    %v1018 = vunpack.c.l.b16 %v123
    %v1019 = vunpack.c.l.b16 %v124
    %v1020 = vunpack.c.l.b16 %v125
    %v1021 = vunpack.c.l.b16 %v126
    %v1022 = vunpack.c.l.b16 %v127
    %v1023 = vunpack.c.l.b16 %v128
    %v1024 = vunpack.c.l.b16 %v129
    %v1025 = vunpack.c.l.b16 %v130
    %v1026 = vunpack.c.l.b16 %v131
    %v1027 = vunpack.c.l.b16 %v132
    %v1028 = vunpack.c.l.b16 %v133
    %v1029 = vunpack.c.l.b16 %v134
    %v1030 = vunpack.c.l.b16 %v135
    %v1031 = vunpack.c.l.b16 %v136
    %v1032 = vunpack.c.l.b16 %v137
    %v1033 = vunpack.c.l.b16 %v138
    %v1034 = vunpack.c.l.b16 %v139
    %v1035 = vunpack.c.l.b16 %v140
    %v1036 = vunpack.c.l.b16 %v141
    %v1037 = vunpack.c.l.b16 %v142
    %v1038 = vunpack.c.l.b16 %v143
    %v1039 = vunpack.c.l.b16 %v144
    %v1040 = vunpack.c.l.b16 %v145
    %v1041 = vunpack.c.l.b16 %v146
    %v1042 = vunpack.c.l.b16 %v147
    %v1043 = vunpack.c.l.b16 %v148
    %v1044 = vunpack.c.l.b16 %v149
    %v1045 = vunpack.c.l.b16 %v150
    %v1046 = vunpack.c.l.b16 %v151
    %v1047 = vunpack.c.l.b16 %v152
    %v1048 = vunpack.c.l.b16 %v153
    %v1049 = vunpack.c.l.b16 %v154
    %v1050 = vunpack.c.l.b16 %v155
    %v1051 = vunpack.c.l.b16 %v156
    %v1052 = vunpack.c.l.b16 %v157
    %v1053 = vunpack.c.l.b16 %v158
    %v1054 = vunpack.c.l.b16 %v159
    %v1055 = vunpack.c.l.b16 %v160
    %v1056 = vunpack.c.l.b16 %v161
    %v1057 = vunpack.c.l.b16 %v162
    %v1058 = vunpack.c.l.b16 %v163
    %v1059 = vunpack.c.l.b16 %v164
    %v1060 = vunpack.c.l.b16 %v165
    %v1061 = vunpack.c.l.b16 %v166
    %v1062 = vunpack.c.l.b16 %v167
    %v1063 = vunpack.c.l.b16 %v168
    %v1064 = vunpack.c.l.b16 %v169
    %v1065 = vunpack.c.l.b16 %v170
    %v1066 = vunpack.c.l.b16 %v171
    %v1067 = vunpack.c.l.b16 %v172
    %v1068 = vunpack.c.l.b16 %v173
    %v1069 = vunpack.c.l.b16 %v174
    %v1070 = vunpack.c.l.b16 %v175
    %v1071 = vunpack.c.l.b16 %v176
    %v1072 = vunpack.c.l.b16 %v177
    %v1073 = vunpack.c.l.b16 %v178
    %v1074 = vunpack.c.l.b16 %v179
    %v1075 = vunpack.c.l.b16 %v180
    %v1076 = vunpack.c.l.b16 %v181
    %v1077 = vunpack.c.l.b16 %v182
    %v1078 = vunpack.c.l.b16 %v183
    %v1079 = vunpack.c.l.b16 %v184
    %v1080 = vunpack.c.l.b16 %v185
    %v1081 = vunpack.c.l.b16 %v186
    %v1082 = vunpack.c.l.b16 %v187
    %v1083 = vunpack.c.l.b16 %v188
    %v1084 = vunpack.c.l.b16 %v189
    %v1085 = vunpack.c.l.b16 %v190
    %v1086 = vunpack.c.l.b16 %v191
    %v1087 = vunpack.c.l.b16 %v192
    %v1088 = vunpack.c.l.b16 %v193
    %v1089 = vunpack.c.l.b16 %v194
    %v1090 = vunpack.c.l.b16 %v195
    %v1091 = vunpack.c.l.b16 %v196
    %v1092 = vunpack.c.l.b16 %v197
    %v1093 = vunpack.c.l.b16 %v198
    %v1094 = vunpack.c.l.b16 %v199
    %v1095 = vunpack.c.l.b16 %v200
    %v1096 = vunpack.c.l.b16 %v201
    %v1097 = vunpack.c.l.b16 %v202
    %v1098 = vunpack.c.l.b16 %v203
    %v1099 = vunpack.c.l.b16 %v204
    %v1100 = vunpack.c.l.b16 %v205
    %v1101 = vunpack.c.l.b16 %v206
    %v1102 = vunpack.c.l.b16 %v207
    %v1103 = vunpack.c.l.b16 %v208
    %v1104 = vunpack.c.l.b16 %v209
    %v1105 = vunpack.c.l.b16 %v210
    %v1106 = vunpack.c.l.b16 %v211
    %v1107 = vunpack.c.l.b16 %v212
    %v1108 = vunpack.c.l.b16 %v213
    %v1109 = vunpack.c.l.b16 %v214
    %v1110 = vunpack.c.l.b16 %v215
    %v1111 = vunpack.c.l.b16 %v216
    %v1112 = vunpack.c.l.b16 %v217
    %v1113 = vunpack.c.l.b16 %v218
    %v1114 = vunpack.c.l.b16 %v219
    %v1115 = vunpack.c.l.b16 %v220
    %v1116 = vunpack.c.l.b16 %v221
    %v1117 = vunpack.c.l.b16 %v222
    %v1118 = vunpack.c.l.b16 %v223
    %v1119 = vunpack.c.l.b16 %v224
    %v1120 = vunpack.c.l.b16 %v225
    %v1121 = vunpack.c.l.b16 %v226
    %v1122 = vunpack.c.l.b16 %v227
    %v1123 = vunpack.c.l.b16 %v228
    %v1124 = vunpack.c.l.b16 %v229
    %v1125 = vunpack.c.l.b16 %v230
    %v1126 = vunpack.c.l.b16 %v231
    %v1127 = vunpack.c.l.b16 %v232
    %v1128 = vunpack.c.l.b16 %v233
    %v1129 = vunpack.c.l.b16 %v234
    %v1130 = vunpack.c.l.b16 %v235
    %v1131 = vunpack.c.l.b16 %v236
    %v1132 = vunpack.c.l.b16 %v237
    %v1133 = vunpack.c.l.b16 %v238
    %v1134 = vunpack.c.l.b16 %v239
    %v1135 = vunpack.c.l.b16 %v240
    %v1136 = vunpack.c.l.b16 %v241
    %v1137 = vunpack.c.l.b16 %v242
    %v1138 = vunpack.c.l.b16 %v243
    %v1139 = vunpack.c.l.b16 %v244
    %v1140 = vunpack.c.l.b16 %v245
    %v1141 = vunpack.c.l.b16 %v246
    %v1142 = vunpack.c.l.b16 %v247
    %v1143 = vunpack.c.l.b16 %v248
    %v1144 = vunpack.c.l.b16 %v249
    %v1145 = vunpack.c.l.b16 %v250
    %v1146 = vunpack.c.l.b16 %v251
    %v1147 = vunpack.c.l.b16 %v252
    %v1148 = vunpack.c.l.b16 %v253
    %v1149 = vunpack.c.l.b16 %v254
    %v1150 = vunpack.c.l.b16 %v255
    %v1151 = vunpack.c.l.b16 %v256
    %v1152 = vunpack.c.l.b16 %v257
    %v1153 = vunpack.c.l.b16 %v258
    %v1154 = vunpack.c.l.b16 %v259
    %v1155 = vunpack.c.l.b16 %v260
    %v1156 = vunpack.c.l.b16 %v261
    %v1157 = vunpack.c.l.b16 %v262
    %v1158 = vunpack.c.l.b16 %v263
    %v1159 = vunpack.c.l.b16 %v264
    %v1160 = vunpack.c.l.b16 %v265
    %v1161 = vunpack.c.l.b16 %v266
    %v1162 = vunpack.c.l.b16 %v267
    %v1163 = vunpack.c.l.b16 %v268
    %v1164 = vunpack.c.l.b16 %v269
    %v1165 = vunpack.c.l.b16 %v270
    %v1166 = vunpack.c.l.b16 %v271
    %v1167 = vunpack.c.l.b16 %v272
    %v1168 = vunpack.c.l.b16 %v273
    %v1169 = vunpack.c.l.b16 %v274
    %v1170 = vunpack.c.l.b16 %v275
    %v1171 = vunpack.c.l.b16 %v276
    %v1172 = vunpack.c.l.b16 %v277
    %v1173 = vunpack.c.l.b16 %v278
    %v1174 = vunpack.c.l.b16 %v279
    %v1175 = vunpack.c.l.b16 %v280
    %v1176 = vunpack.c.l.b16 %v281
    %v1177 = vunpack.c.l.b16 %v282
    %v1178 = vunpack.c.l.b16 %v283
    %v1179 = vunpack.c.l.b16 %v284
    %v1180 = vunpack.c.l.b16 %v285
    %v1181 = vunpack.c.l.b16 %v286
    %v1182 = vunpack.c.l.b16 %v287
    %v1183 = vunpack.c.l.b16 %v288
    %v1184 = vunpack.c.l.b16 %v289
    %v1185 = vunpack.c.l.b16 %v290
    %v1186 = vunpack.c.l.b16 %v291
    %v1187 = vunpack.c.l.b16 %v292
    %v1188 = vunpack.c.l.b16 %v293
    %v1189 = vunpack.c.l.b16 %v294
    %v1190 = vunpack.c.l.b16 %v295
    %v1191 = vunpack.c.l.b16 %v296
    %v1192 = vunpack.c.l.b16 %v297
    %v1193 = vunpack.c.l.b16 %v298
    %v1194 = vunpack.c.l.b16 %v299
    %v1195 = vunpack.c.l.b16 %v300
    %v1196 = vunpack.c.l.b16 %v301
    %v1197 = vunpack.c.l.b16 %v302
    %v1198 = vunpack.c.l.b16 %v303
    %v1199 = vunpack.c.l.b16 %v304
    %v1200 = vunpack.c.l.b16 %v305
    %v1201 = vunpack.c.l.b16 %v306
    %v1202 = vunpack.c.l.b16 %v307
    %v1203 = vunpack.c.l.b16 %v308
    %v1204 = vunpack.c.l.b16 %v309
    %v1205 = vunpack.c.l.b16 %v310
    %v1206 = vunpack.c.l.b16 %v311
    %v1207 = vunpack.c.l.b16 %v312
    %v1208 = vunpack.c.l.b16 %v313
    %v1209 = vunpack.c.l.b16 %v314
    %v1210 = vunpack.c.l.b16 %v315
    %v1211 = vunpack.c.l.b16 %v316
    %v1212 = vunpack.c.l.b16 %v317
    %v1213 = vunpack.c.l.b16 %v318
    %v1214 = vunpack.c.l.b16 %v319
    %v1215 = vunpack.c.l.b16 %v320
    %v1216 = vunpack.c.l.b16 %v321
    %v1217 = vunpack.c.l.b16 %v322
    %v1218 = vunpack.c.l.b16 %v323
    %v1219 = vunpack.c.l.b16 %v324
    %v1220 = vunpack.c.l.b16 %v325
    %v1221 = vunpack.c.l.b16 %v326
    %v1222 = vunpack.c.l.b16 %v327
    %v1223 = vunpack.c.l.b16 %v328
    %v1224 = vunpack.c.l.b16 %v329
    %v1225 = vunpack.c.l.b16 %v330
    %v1226 = vunpack.c.l.b16 %v331
    %v1227 = vunpack.c.l.b16 %v332
    %v1228 = vunpack.c.l.b16 %v333
    %v1229 = vunpack.c.l.b16 %v334
    %v1230 = vunpack.c.l.b16 %v335
    %v1231 = vunpack.c.l.b16 %v336
    %v1232 = vunpack.c.l.b16 %v337
    %v1233 = vunpack.c.l.b16 %v338
    %v1234 = vunpack.c.l.b16 %v339
    %v1235 = vunpack.c.l.b16 %v340
    %v1236 = vunpack.c.l.b16 %v341
    %v1237 = vunpack.c.l.b16 %v342
    %v1238 = vunpack.c.l.b16 %v343
    %v1239 = vunpack.c.l.b16 %v344
    %v1240 = vunpack.c.l.b16 %v345
    %v1241 = vunpack.c.l.b16 %v346
    %v1242 = vunpack.c.l.b16 %v347
    %v1243 = vunpack.c.l.b16 %v348
    %v1244 = vunpack.c.l.b16 %v349
    %v1245 = vunpack.c.l.b16 %v350
    %v1246 = vunpack.c.l.b16 %v351
    %v1247 = vunpack.c.l.b16 %v352
    %v1248 = vunpack.c.l.b16 %v353
    %v1249 = vunpack.c.l.b16 %v354
    %v1250 = vunpack.c.l.b16 %v355
    %v1251 = vunpack.c.l.b16 %v356
    %v1252 = vunpack.c.l.b16 %v357
    %v1253 = vunpack.c.l.b16 %v358
    %v1254 = vunpack.c.l.b16 %v359
    %v1255 = vunpack.c.l.b16 %v360
    %v1256 = vunpack.c.l.b16 %v361
    %v1257 = vunpack.c.l.b16 %v362
    %v1258 = vunpack.c.l.b16 %v363
    %v1259 = vunpack.c.l.b16 %v364
    %v1260 = vunpack.c.l.b16 %v365
    %v1261 = vunpack.c.l.b16 %v366
    %v1262 = vunpack.c.l.b16 %v367
    %v1263 = vunpack.c.l.b16 %v368
    %v1264 = vunpack.c.l.b16 %v369
    %v1265 = vunpack.c.l.b16 %v370
    %v1266 = vunpack.c.l.b16 %v371
    %v1267 = vunpack.c.l.b16 %v372
    %v1268 = vunpack.c.l.b16 %v373
    %v1269 = vunpack.c.l.b16 %v374
    %v1270 = vunpack.c.l.b16 %v375
    %v1271 = vunpack.c.l.b16 %v376
    %v1272 = vunpack.c.l.b16 %v377
    %v1273 = vunpack.c.l.b16 %v378
    %v1274 = vunpack.c.l.b16 %v379
    %v1275 = vunpack.c.l.b16 %v380
    %v1276 = vunpack.c.l.b16 %v381
    %v1277 = vunpack.c.l.b16 %v382
    %v1278 = vunpack.c.l.b16 %v383
    %v1279 = vunpack.c.l.b16 %v384
    %v1280 = vunpack.c.l.b16 %v385
    %v1281 = vunpack.c.l.b16 %v386
    %v1282 = vunpack.c.l.b16 %v387
    %v1283 = vunpack.c.l.b16 %v388
    %v1284 = vunpack.c.l.b16 %v389
    %v1285 = vunpack.c.l.b16 %v390
    %v1286 = vunpack.c.l.b16 %v391
    %v1287 = vunpack.c.l.b16 %v392
    %v1288 = vunpack.c.l.b16 %v393
    %v1289 = vunpack.c.l.b16 %v394
    %v1290 = vunpack.c.l.b16 %v395
    %v1291 = vunpack.c.l.b16 %v396
    %v1292 = vunpack.c.l.b16 %v397
    %v1293 = vunpack.c.l.b16 %v398
    %v1294 = vunpack.c.l.b16 %v399
    %v1295 = vunpack.c.l.b16 %v400
    %v1296 = vunpack.c.l.b16 %v401
    %v1297 = vunpack.c.l.b16 %v402
    %v1298 = vunpack.c.l.b16 %v403
    %v1299 = vunpack.c.l.b16 %v404
    %v1300 = vunpack.c.l.b16 %v405
    %v1301 = vunpack.c.l.b16 %v406
    %v1302 = vunpack.c.l.b16 %v407
    %v1303 = vunpack.c.l.b16 %v408
    %v1304 = vunpack.c.l.b16 %v409
    %v1305 = vunpack.c.l.b16 %v410
    %v1306 = vunpack.c.l.b16 %v411
    %v1307 = vunpack.c.l.b16 %v412
    %v1308 = vunpack.c.l.b16 %v413
    %v1309 = vunpack.c.l.b16 %v414
    %v1310 = vunpack.c.l.b16 %v415
    %v1311 = vunpack.c.l.b16 %v416
    %v1312 = vunpack.c.l.b16 %v417
    %v1313 = vunpack.c.l.b16 %v418
    %v1314 = vunpack.c.l.b16 %v419
    %v1315 = vunpack.c.l.b16 %v420
    %v1316 = vunpack.c.l.b16 %v421
    %v1317 = vunpack.c.l.b16 %v422
    %v1318 = vunpack.c.l.b16 %v423
    %v1319 = vunpack.c.l.b16 %v424
    %v1320 = vunpack.c.l.b16 %v425
    %v1321 = vunpack.c.l.b16 %v426
    %v1322 = vunpack.c.l.b16 %v427
    %v1323 = vunpack.c.l.b16 %v428
    %v1324 = vunpack.c.l.b16 %v429
    %v1325 = vunpack.c.l.b16 %v430
    %v1326 = vunpack.c.l.b16 %v431
    %v1327 = vunpack.c.l.b16 %v432
    %v1328 = vunpack.c.l.b16 %v433
    %v1329 = vunpack.c.l.b16 %v434
    %v1330 = vunpack.c.l.b16 %v435
    %v1331 = vunpack.c.l.b16 %v436
    %v1332 = vunpack.c.l.b16 %v437
    %v1333 = vunpack.c.l.b16 %v438
    %v1334 = vunpack.c.l.b16 %v439
    %v1335 = vunpack.c.l.b16 %v440
    %v1336 = vunpack.c.l.b16 %v441
    %v1337 = vunpack.c.l.b16 %v442
    %v1338 = vunpack.c.l.b16 %v443
    %v1339 = vunpack.c.l.b16 %v444
    %v1340 = vunpack.c.l.b16 %v445
    %v1341 = vunpack.c.l.b16 %v446
    %v1342 = vunpack.c.l.b16 %v447
    %v1343 = vunpack.c.l.b16 %v448
    %v1344 = vunpack.c.l.b16 %v449
    %v1345 = vunpack.c.l.b16 %v450
    %v1346 = vunpack.c.l.b16 %v451
    %v1347 = vunpack.c.l.b16 %v452
    %v1348 = vunpack.c.l.b16 %v453
    %v1349 = vunpack.c.l.b16 %v454
    %v1350 = vunpack.c.l.b16 %v455
    %v1351 = vunpack.c.l.b16 %v456
    %v1352 = vunpack.c.l.b16 %v457
    %v1353 = vunpack.c.l.b16 %v458
    %v1354 = vunpack.c.l.b16 %v459
    %v1355 = vunpack.c.l.b16 %v460
    %v1356 = vunpack.c.l.b16 %v461
    %v1357 = vunpack.c.l.b16 %v462
    %v1358 = vunpack.c.l.b16 %v463
    %v1359 = vunpack.c.l.b16 %v464
    %v1360 = vunpack.c.l.b16 %v465
    %v1361 = vunpack.c.l.b16 %v466
    %v1362 = vunpack.c.l.b16 %v467
    %v1363 = vunpack.c.l.b16 %v468
    %v1364 = vunpack.c.l.b16 %v469
    %v1365 = vunpack.c.l.b16 %v470
    %v1366 = vunpack.c.l.b16 %v471
    %v1367 = vunpack.c.l.b16 %v472
    %v1368 = vunpack.c.l.b16 %v473
    %v1369 = vunpack.c.l.b16 %v474
    %v1370 = vunpack.c.l.b16 %v475
    %v1371 = vunpack.c.l.b16 %v476
    %v1372 = vunpack.c.l.b16 %v477
    %v1373 = vunpack.c.l.b16 %v478
    %v1374 = vunpack.c.l.b16 %v479
    %v1375 = vunpack.c.l.b16 %v480
    %v1376 = vunpack.c.l.b16 %v481
    %v1377 = vunpack.c.l.b16 %v482
    %v1378 = vunpack.c.l.b16 %v483
    %v1379 = vunpack.c.l.b16 %v484
    %v1380 = vunpack.c.l.b16 %v485
    %v1381 = vunpack.c.l.b16 %v486
    %v1382 = vunpack.c.l.b16 %v487
    %v1383 = vunpack.c.l.b16 %v488
    %v1384 = vunpack.c.l.b16 %v489
    %v1385 = vunpack.c.l.b16 %v490
    %v1386 = vpack.c.b16 %v1003, %v1002
    %v1387 = vpack.c.b16 %v1005, %v1004
    %v1388 = vpack.c.b16 %v1007, %v1006
    %v1389 = vpack.c.b16 %v1009, %v1008
    %v1390 = vpack.c.b16 %v1011, %v1010
    %v1391 = vpack.c.b16 %v1013, %v1012
    %v1392 = vpack.c.b16 %v1015, %v1014
    %v1393 = vpack.c.b16 %v1017, %v1016
    %v1394 = vpack.c.b16 %v1019, %v1018
    %v1395 = vpack.c.b16 %v1021, %v1020
    %v1396 = vpack.c.b16 %v1023, %v1022
    %v1397 = vpack.c.b16 %v1025, %v1024
    %v1398 = vpack.c.b16 %v1027, %v1026
    %v1399 = vpack.c.b16 %v1029, %v1028
    %v1400 = vpack.c.b16 %v1031, %v1030
    %v1401 = vpack.c.b16 %v1033, %v1032
    %v1402 = vpack.c.b16 %v1035, %v1034
    %v1403 = vpack.c.b16 %v1037, %v1036
    %v1404 = vpack.c.b16 %v1039, %v1038
    %v1405 = vpack.c.b16 %v1041, %v1040
    %v1406 = vpack.c.b16 %v1043, %v1042
    %v1407 = vpack.c.b16 %v1045, %v1044
    %v1408 = vpack.c.b16 %v1047, %v1046
    %v1409 = vpack.c.b16 %v1049, %v1048
    %v1410 = vpack.c.b16 %v1051, %v1050
    %v1411 = vpack.c.b16 %v1053, %v1052
    %v1412 = vpack.c.b16 %v1055, %v1054
    %v1413 = vpack.c.b16 %v1057, %v1056
    %v1414 = vpack.c.b16 %v1059, %v1058
    %v1415 = vpack.c.b16 %v1061, %v1060
    %v1416 = vpack.c.b16 %v1063, %v1062
    %v1417 = vpack.c.b16 %v1065, %v1064
    %v1418 = vpack.c.b16 %v1067, %v1066
    %v1419 = vpack.c.b16 %v1069, %v1068
    %v1420 = vpack.c.b16 %v1071, %v1070
    %v1421 = vpack.c.b16 %v1073, %v1072
    %v1422 = vpack.c.b16 %v1075, %v1074
    %v1423 = vpack.c.b16 %v1077, %v1076
    %v1424 = vpack.c.b16 %v1079, %v1078
    %v1425 = vpack.c.b16 %v1081, %v1080
    %v1426 = vpack.c.b16 %v1083, %v1082
    %v1427 = vpack.c.b16 %v1085, %v1084
    %v1428 = vpack.c.b16 %v1087, %v1086
    %v1429 = vpack.c.b16 %v1089, %v1088
    %v1430 = vpack.c.b16 %v1091, %v1090
    %v1431 = vpack.c.b16 %v1093, %v1092
    %v1432 = vpack.c.b16 %v1095, %v1094
    %v1433 = vpack.c.b16 %v1097, %v1096
    %v1434 = vpack.c.b16 %v1099, %v1098
    %v1435 = vpack.c.b16 %v1101, %v1100
    %v1436 = vpack.c.b16 %v1103, %v1102
    %v1437 = vpack.c.b16 %v1105, %v1104
    %v1438 = vpack.c.b16 %v1107, %v1106
    %v1439 = vpack.c.b16 %v1109, %v1108
    %v1440 = vpack.c.b16 %v1111, %v1110
    %v1441 = vpack.c.b16 %v1113, %v1112
    %v1442 = vpack.c.b16 %v1115, %v1114
    %v1443 = vpack.c.b16 %v1117, %v1116
    %v1444 = vpack.c.b16 %v1119, %v1118
    %v1445 = vpack.c.b16 %v1121, %v1120
    %v1446 = vpack.c.b16 %v1123, %v1122
    %v1447 = vpack.c.b16 %v1125, %v1124
    %v1448 = vpack.c.b16 %v1127, %v1126
    %v1449 = vpack.c.b16 %v1129, %v1128
    %v1450 = vpack.c.b16 %v1131, %v1130
    %v1451 = vpack.c.b16 %v1133, %v1132
    %v1452 = vpack.c.b16 %v1135, %v1134
    %v1453 = vpack.c.b16 %v1137, %v1136
    %v1454 = vpack.c.b16 %v1139, %v1138
    %v1455 = vpack.c.b16 %v1141, %v1140
    %v1456 = vpack.c.b16 %v1143, %v1142
    %v1457 = vpack.c.b16 %v1145, %v1144
    %v1458 = vpack.c.b16 %v1147, %v1146
    %v1459 = vpack.c.b16 %v1149, %v1148
    %v1460 = vpack.c.b16 %v1151, %v1150
    %v1461 = vpack.c.b16 %v1153, %v1152
    %v1462 = vpack.c.b16 %v1155, %v1154
    %v1463 = vpack.c.b16 %v1157, %v1156
    %v1464 = vpack.c.b16 %v1159, %v1158
    %v1465 = vpack.c.b16 %v1161, %v1160
    %v1466 = vpack.c.b16 %v1163, %v1162
    %v1467 = vpack.c.b16 %v1165, %v1164
    %v1468 = vpack.c.b16 %v1167, %v1166
    %v1469 = vpack.c.b16 %v1169, %v1168
    %v1470 = vpack.c.b16 %v1171, %v1170
    %v1471 = vpack.c.b16 %v1173, %v1172
    %v1472 = vpack.c.b16 %v1175, %v1174
    %v1473 = vpack.c.b16 %v1177, %v1176
    %v1474 = vpack.c.b16 %v1179, %v1178
    %v1475 = vpack.c.b16 %v1181, %v1180
    %v1476 = vpack.c.b16 %v1183, %v1182
    %v1477 = vpack.c.b16 %v1185, %v1184
    %v1478 = vpack.c.b16 %v1187, %v1186
    %v1479 = vpack.c.b16 %v1189, %v1188
    %v1480 = vpack.c.b16 %v1191, %v1190
    %v1481 = vpack.c.b16 %v1193, %v1192
    %v1482 = vpack.c.b16 %v1195, %v1194
    %v1483 = vpack.c.b16 %v1197, %v1196
    %v1484 = vpack.c.b16 %v1199, %v1198
    %v1485 = vpack.c.b16 %v1201, %v1200
    %v1486 = vpack.c.b16 %v1203, %v1202
    %v1487 = vpack.c.b16 %v1205, %v1204
    %v1488 = vpack.c.b16 %v1207, %v1206
    %v1489 = vpack.c.b16 %v1209, %v1208
    %v1490 = vpack.c.b16 %v1211, %v1210
    %v1491 = vpack.c.b16 %v1213, %v1212
    %v1492 = vpack.c.b16 %v1215, %v1214
    %v1493 = vpack.c.b16 %v1217, %v1216
    %v1494 = vpack.c.b16 %v1219, %v1218
    %v1495 = vpack.c.b16 %v1221, %v1220
    %v1496 = vpack.c.b16 %v1223, %v1222
    %v1497 = vpack.c.b16 %v1225, %v1224
    %v1498 = vpack.c.b16 %v1227, %v1226
    %v1499 = vpack.c.b16 %v1229, %v1228
    %v1500 = vpack.c.b16 %v1231, %v1230
    %v1501 = vpack.c.b16 %v1233, %v1232
    %v1502 = vpack.c.b16 %v1235, %v1234
    %v1503 = vpack.c.b16 %v1237, %v1236
    %v1504 = vpack.c.b16 %v1239, %v1238
    %v1505 = vpack.c.b16 %v1241, %v1240
    %v1506 = vpack.c.b16 %v1243, %v1242
    %v1507 = vpack.c.b16 %v1245, %v1244
    %v1508 = vpack.c.b16 %v1247, %v1246
    %v1509 = vpack.c.b16 %v1249, %v1248
    %v1510 = vpack.c.b16 %v1251, %v1250
    %v1511 = vpack.c.b16 %v1253, %v1252
    %v1512 = vpack.c.b16 %v1255, %v1254
    %v1513 = vpack.c.b16 %v1257, %v1256
    %v1514 = vpack.c.b16 %v1259, %v1258
    %v1515 = vpack.c.b16 %v1261, %v1260
    %v1516 = vpack.c.b16 %v1263, %v1262
    %v1517 = vpack.c.b16 %v1265, %v1264
    %v1518 = vpack.c.b16 %v1267, %v1266
    %v1519 = vpack.c.b16 %v1269, %v1268
    %v1520 = vpack.c.b16 %v1271, %v1270
    %v1521 = vpack.c.b16 %v1273, %v1272
    %v1522 = vpack.c.b16 %v1275, %v1274
    %v1523 = vpack.c.b16 %v1277, %v1276
    %v1524 = vpack.c.b16 %v1279, %v1278
    %v1525 = vpack.c.b16 %v1281, %v1280
    %v1526 = vpack.c.b16 %v1283, %v1282
    %v1527 = vpack.c.b16 %v1285, %v1284
    %v1528 = vpack.c.b16 %v1287, %v1286
    %v1529 = vpack.c.b16 %v1289, %v1288
    %v1530 = vpack.c.b16 %v1291, %v1290
    %v1531 = vpack.c.b16 %v1293, %v1292
    %v1532 = vpack.c.b16 %v1295, %v1294
    %v1533 = vpack.c.b16 %v1297, %v1296
    %v1534 = vpack.c.b16 %v1299, %v1298
    %v1535 = vpack.c.b16 %v1301, %v1300
    %v1536 = vpack.c.b16 %v1303, %v1302
    %v1537 = vpack.c.b16 %v1305, %v1304
    %v1538 = vpack.c.b16 %v1307, %v1306
    %v1539 = vpack.c.b16 %v1309, %v1308
    %v1540 = vpack.c.b16 %v1311, %v1310
    %v1541 = vpack.c.b16 %v1313, %v1312
    %v1542 = vpack.c.b16 %v1315, %v1314
    %v1543 = vpack.c.b16 %v1317, %v1316
    %v1544 = vpack.c.b16 %v1319, %v1318
    %v1545 = vpack.c.b16 %v1321, %v1320
    %v1546 = vpack.c.b16 %v1323, %v1322
    %v1547 = vpack.c.b16 %v1325, %v1324
    %v1548 = vpack.c.b16 %v1327, %v1326
    %v1549 = vpack.c.b16 %v1329, %v1328
    %v1550 = vpack.c.b16 %v1331, %v1330
    %v1551 = vpack.c.b16 %v1333, %v1332
    %v1552 = vpack.c.b16 %v1335, %v1334
    %v1553 = vpack.c.b16 %v1337, %v1336
    %v1554 = vpack.c.b16 %v1339, %v1338
    %v1555 = vpack.c.b16 %v1341, %v1340
    %v1556 = vpack.c.b16 %v1343, %v1342
    %v1557 = vpack.c.b16 %v1345, %v1344
    %v1558 = vpack.c.b16 %v1347, %v1346
    %v1559 = vpack.c.b16 %v1349, %v1348
    %v1560 = vpack.c.b16 %v1351, %v1350
    %v1561 = vpack.c.b16 %v1353, %v1352
    %v1562 = vpack.c.b16 %v1355, %v1354
    %v1563 = vpack.c.b16 %v1357, %v1356
    %v1564 = vpack.c.b16 %v1359, %v1358
    %v1565 = vpack.c.b16 %v1361, %v1360
    %v1566 = vpack.c.b16 %v1363, %v1362
    %v1567 = vpack.c.b16 %v1365, %v1364
    %v1568 = vpack.c.b16 %v1367, %v1366
    %v1569 = vpack.c.b16 %v1369, %v1368
    %v1570 = vpack.c.b16 %v1371, %v1370
    %v1571 = vpack.c.b16 %v1373, %v1372
    %v1572 = vpack.c.b16 %v1375, %v1374
    %v1573 = vpack.c.b16 %v1377, %v1376
    %v1574 = vpack.c.b16 %v1379, %v1378
    %v1575 = vpack.c.b16 %v1381, %v1380
    %v1576 = vpack.c.b16 %v1383, %v1382
    %v1577 = vpack.c.b16 %v1385, %v1384
    %1770 = vmatprep.subr.bf16.mxu0 0
    %1771 = vmatpush1.bf16.msra.mxu0 %v1393
    %1772 = vmatprep.subr.bf16.mxu0 0
    %1773 = vmatpush1.bf16.msra.mxu0 %v1392
    %1774 = vmatprep.subr.bf16.mxu0 0
    %1775 = vmatpush1.bf16.msra.mxu0 %v1391
    %1776 = vmatprep.subr.bf16.mxu0 0
    %1777 = vmatpush1.bf16.msra.mxu0 %v1390
    %1778 = vmatprep.subr.bf16.mxu0 0
    %1779 = vmatpush1.bf16.msra.mxu0 %v1389
    %1780 = vmatprep.subr.bf16.mxu0 0
    %1781 = vmatpush1.bf16.msra.mxu0 %v1388
    %1782 = vmatprep.subr.bf16.mxu0 0
    %1783 = vmatpush1.bf16.msra.mxu0 %v1387
    %1784 = vmatprep.subr.bf16.mxu0 0
    %1785 = vmatpush1.bf16.msra.mxu0 %v1386
    %1786 = vmatprep.subr.bf16.mxu0 0
    %1787 = vmatpush2.bf16.msra.mxu0 %v1401
    %1788 = vmatprep.subr.bf16.mxu0 0
    %1789 = vmatpush2.bf16.msra.mxu0 %v1400
    %1790 = vmatprep.subr.bf16.mxu0 0
    %1791 = vmatpush2.bf16.msra.mxu0 %v1399
    %1792 = vmatprep.subr.bf16.mxu0 0
    %1793 = vmatpush2.bf16.msra.mxu0 %v1398
    %1794 = vmatprep.subr.bf16.mxu0 0
    %1795 = vmatpush2.bf16.msra.mxu0 %v1397
    %1796 = vmatprep.subr.bf16.mxu0 0
    %1797 = vmatpush2.bf16.msra.mxu0 %v1396
    %1798 = vmatprep.subr.bf16.mxu0 0
    %1799 = vmatpush2.bf16.msra.mxu0 %v1395
    %1800 = vmatprep.subr.bf16.mxu0 0
    %1801 = vmatpush2.bf16.msra.mxu0 %v1394
    %1802 = vmatprep.mubr.bf16.mxu0 %v571
    %1803 = vmatmul.mubr.bf16.gmra.mxu0 %v570
    %v1804 = vpop.f32.mrf.mxu0
    %v1805 = vadd.f32 %v496, %v1804
    %v1806 = vpop.f32.mrf.mxu0
    %v1807 = vpop.f32.mrf.mxu0
    %v1808 = vadd.f32 %v496, %v1807
    %v1809 = vpop.f32.mrf.mxu0
    %1810 = vdwg.mxu0
    %1811 = vmatprep.subr.bf16.mxu0 0
    %1812 = vmatpush1.bf16.msra.mxu0 %v1409
    %1813 = vmatprep.subr.bf16.mxu0 0
    %1814 = vmatpush1.bf16.msra.mxu0 %v1408
    %1815 = vmatprep.subr.bf16.mxu0 0
    %1816 = vmatpush1.bf16.msra.mxu0 %v1407
    %1817 = vmatprep.subr.bf16.mxu0 0
    %1818 = vmatpush1.bf16.msra.mxu0 %v1406
    %1819 = vmatprep.subr.bf16.mxu0 0
    %1820 = vmatpush1.bf16.msra.mxu0 %v1405
    %1821 = vmatprep.subr.bf16.mxu0 0
    %1822 = vmatpush1.bf16.msra.mxu0 %v1404
    %1823 = vmatprep.subr.bf16.mxu0 0
    %1824 = vmatpush1.bf16.msra.mxu0 %v1403
    %1825 = vmatprep.subr.bf16.mxu0 0
    %1826 = vmatpush1.bf16.msra.mxu0 %v1402
    %1827 = vmatprep.subr.bf16.mxu0 0
    %1828 = vmatpush2.bf16.msra.mxu0 %v1417
    %1829 = vmatprep.subr.bf16.mxu0 0
    %1830 = vmatpush2.bf16.msra.mxu0 %v1416
    %1831 = vmatprep.subr.bf16.mxu0 0
    %1832 = vmatpush2.bf16.msra.mxu0 %v1415
    %1833 = vmatprep.subr.bf16.mxu0 0
    %1834 = vmatpush2.bf16.msra.mxu0 %v1414
    %1835 = vmatprep.subr.bf16.mxu0 0
    %1836 = vmatpush2.bf16.msra.mxu0 %v1413
    %1837 = vmatprep.subr.bf16.mxu0 0
    %1838 = vmatpush2.bf16.msra.mxu0 %v1412
    %1839 = vmatprep.subr.bf16.mxu0 0
    %1840 = vmatpush2.bf16.msra.mxu0 %v1411
    %1841 = vmatprep.subr.bf16.mxu0 0
    %1842 = vmatpush2.bf16.msra.mxu0 %v1410
    %1843 = vmatprep.mubr.bf16.mxu0 %v573
    %1844 = vmatmul.mubr.bf16.gmra.mxu0 %v572
    %v1845 = vpop.f32.mrf.mxu0
    %v1846 = vadd.f32 %v1805, %v1845
    %v1847 = vpop.f32.mrf.mxu0
    %v1848 = vpop.f32.mrf.mxu0
    %v1849 = vadd.f32 %v1808, %v1848
    %v1850 = vpop.f32.mrf.mxu0
    %1851 = vdwg.mxu0
    %1852 = vmatprep.subr.bf16.mxu0 0
    %1853 = vmatpush1.bf16.msra.mxu0 %v1425
    %1854 = vmatprep.subr.bf16.mxu0 0
    %1855 = vmatpush1.bf16.msra.mxu0 %v1424
    %1856 = vmatprep.subr.bf16.mxu0 0
    %1857 = vmatpush1.bf16.msra.mxu0 %v1423
    %1858 = vmatprep.subr.bf16.mxu0 0
    %1859 = vmatpush1.bf16.msra.mxu0 %v1422
    %1860 = vmatprep.subr.bf16.mxu0 0
    %1861 = vmatpush1.bf16.msra.mxu0 %v1421
    %1862 = vmatprep.subr.bf16.mxu0 0
    %1863 = vmatpush1.bf16.msra.mxu0 %v1420
    %1864 = vmatprep.subr.bf16.mxu0 0
    %1865 = vmatpush1.bf16.msra.mxu0 %v1419
    %1866 = vmatprep.subr.bf16.mxu0 0
    %1867 = vmatpush1.bf16.msra.mxu0 %v1418
    %1868 = vmatprep.subr.bf16.mxu0 0
    %1869 = vmatpush2.bf16.msra.mxu0 %v1433
    %1870 = vmatprep.subr.bf16.mxu0 0
    %1871 = vmatpush2.bf16.msra.mxu0 %v1432
    %1872 = vmatprep.subr.bf16.mxu0 0
    %1873 = vmatpush2.bf16.msra.mxu0 %v1431
    %1874 = vmatprep.subr.bf16.mxu0 0
    %1875 = vmatpush2.bf16.msra.mxu0 %v1430
    %1876 = vmatprep.subr.bf16.mxu0 0
    %1877 = vmatpush2.bf16.msra.mxu0 %v1429
    %1878 = vmatprep.subr.bf16.mxu0 0
    %1879 = vmatpush2.bf16.msra.mxu0 %v1428
    %1880 = vmatprep.subr.bf16.mxu0 0
    %1881 = vmatpush2.bf16.msra.mxu0 %v1427
    %1882 = vmatprep.subr.bf16.mxu0 0
    %1883 = vmatpush2.bf16.msra.mxu0 %v1426
    %1884 = vmatprep.mubr.bf16.mxu0 %v575
    %1885 = vmatmul.mubr.bf16.gmra.mxu0 %v574
    %v1886 = vpop.f32.mrf.mxu0
    %v1887 = vadd.f32 %v1846, %v1886
    %v1888 = vpop.f32.mrf.mxu0
    %v1889 = vpop.f32.mrf.mxu0
    %v1890 = vadd.f32 %v1849, %v1889
    %v1891 = vpop.f32.mrf.mxu0
    %1892 = vdwg.mxu0
    %1893 = vmatprep.subr.bf16.mxu0 0
    %1894 = vmatpush1.bf16.msra.mxu0 %v1441
    %1895 = vmatprep.subr.bf16.mxu0 0
    %1896 = vmatpush1.bf16.msra.mxu0 %v1440
    %1897 = vmatprep.subr.bf16.mxu0 0
    %1898 = vmatpush1.bf16.msra.mxu0 %v1439
    %1899 = vmatprep.subr.bf16.mxu0 0
    %1900 = vmatpush1.bf16.msra.mxu0 %v1438
    %1901 = vmatprep.subr.bf16.mxu0 0
    %1902 = vmatpush1.bf16.msra.mxu0 %v1437
    %1903 = vmatprep.subr.bf16.mxu0 0
    %1904 = vmatpush1.bf16.msra.mxu0 %v1436
    %1905 = vmatprep.subr.bf16.mxu0 0
    %1906 = vmatpush1.bf16.msra.mxu0 %v1435
    %1907 = vmatprep.subr.bf16.mxu0 0
    %1908 = vmatpush1.bf16.msra.mxu0 %v1434
    %1909 = vmatprep.subr.bf16.mxu0 0
    %1910 = vmatpush2.bf16.msra.mxu0 %v1449
    %1911 = vmatprep.subr.bf16.mxu0 0
    %1912 = vmatpush2.bf16.msra.mxu0 %v1448
    %1913 = vmatprep.subr.bf16.mxu0 0
    %1914 = vmatpush2.bf16.msra.mxu0 %v1447
    %1915 = vmatprep.subr.bf16.mxu0 0
    %1916 = vmatpush2.bf16.msra.mxu0 %v1446
    %1917 = vmatprep.subr.bf16.mxu0 0
    %1918 = vmatpush2.bf16.msra.mxu0 %v1445
    %1919 = vmatprep.subr.bf16.mxu0 0
    %1920 = vmatpush2.bf16.msra.mxu0 %v1444
    %1921 = vmatprep.subr.bf16.mxu0 0
    %1922 = vmatpush2.bf16.msra.mxu0 %v1443
    %1923 = vmatprep.subr.bf16.mxu0 0
    %1924 = vmatpush2.bf16.msra.mxu0 %v1442
    %1925 = vmatprep.mubr.bf16.mxu0 %v577
    %1926 = vmatmul.mubr.bf16.gmra.mxu0 %v576
    %v1927 = vpop.f32.mrf.mxu0
    %v1928 = vadd.f32 %v1887, %v1927
    %v1929 = vpop.f32.mrf.mxu0
    %v1930 = vpop.f32.mrf.mxu0
    %v1931 = vadd.f32 %v1890, %v1930
    %v1932 = vpop.f32.mrf.mxu0
    %1933 = vdwg.mxu0
    %1934 = vmatprep.subr.bf16.mxu0 0
    %1935 = vmatpush1.bf16.msra.mxu0 %v1457
    %1936 = vmatprep.subr.bf16.mxu0 0
    %1937 = vmatpush1.bf16.msra.mxu0 %v1456
    %1938 = vmatprep.subr.bf16.mxu0 0
    %1939 = vmatpush1.bf16.msra.mxu0 %v1455
    %1940 = vmatprep.subr.bf16.mxu0 0
    %1941 = vmatpush1.bf16.msra.mxu0 %v1454
    %1942 = vmatprep.subr.bf16.mxu0 0
    %1943 = vmatpush1.bf16.msra.mxu0 %v1453
    %1944 = vmatprep.subr.bf16.mxu0 0
    %1945 = vmatpush1.bf16.msra.mxu0 %v1452
    %1946 = vmatprep.subr.bf16.mxu0 0
    %1947 = vmatpush1.bf16.msra.mxu0 %v1451
    %1948 = vmatprep.subr.bf16.mxu0 0
    %1949 = vmatpush1.bf16.msra.mxu0 %v1450
    %1950 = vmatprep.subr.bf16.mxu0 0
    %1951 = vmatpush2.bf16.msra.mxu0 %v1465
    %1952 = vmatprep.subr.bf16.mxu0 0
    %1953 = vmatpush2.bf16.msra.mxu0 %v1464
    %1954 = vmatprep.subr.bf16.mxu0 0
    %1955 = vmatpush2.bf16.msra.mxu0 %v1463
    %1956 = vmatprep.subr.bf16.mxu0 0
    %1957 = vmatpush2.bf16.msra.mxu0 %v1462
    %1958 = vmatprep.subr.bf16.mxu0 0
    %1959 = vmatpush2.bf16.msra.mxu0 %v1461
    %1960 = vmatprep.subr.bf16.mxu0 0
    %1961 = vmatpush2.bf16.msra.mxu0 %v1460
    %1962 = vmatprep.subr.bf16.mxu0 0
    %1963 = vmatpush2.bf16.msra.mxu0 %v1459
    %1964 = vmatprep.subr.bf16.mxu0 0
    %1965 = vmatpush2.bf16.msra.mxu0 %v1458
    %1966 = vmatprep.mubr.bf16.mxu0 %v579
    %1967 = vmatmul.mubr.bf16.gmra.mxu0 %v578
    %v1968 = vpop.f32.mrf.mxu0
    %v1969 = vadd.f32 %v1928, %v1968
    %v1970 = vpop.f32.mrf.mxu0
    %v1971 = vpop.f32.mrf.mxu0
    %v1972 = vadd.f32 %v1931, %v1971
    %v1973 = vpop.f32.mrf.mxu0
    %1974 = vdwg.mxu0
    %1975 = vmatprep.subr.bf16.mxu0 0
    %1976 = vmatpush1.bf16.msra.mxu0 %v1473
    %1977 = vmatprep.subr.bf16.mxu0 0
    %1978 = vmatpush1.bf16.msra.mxu0 %v1472
    %1979 = vmatprep.subr.bf16.mxu0 0
    %1980 = vmatpush1.bf16.msra.mxu0 %v1471
    %1981 = vmatprep.subr.bf16.mxu0 0
    %1982 = vmatpush1.bf16.msra.mxu0 %v1470
    %1983 = vmatprep.subr.bf16.mxu0 0
    %1984 = vmatpush1.bf16.msra.mxu0 %v1469
    %1985 = vmatprep.subr.bf16.mxu0 0
    %1986 = vmatpush1.bf16.msra.mxu0 %v1468
    %1987 = vmatprep.subr.bf16.mxu0 0
    %1988 = vmatpush1.bf16.msra.mxu0 %v1467
    %1989 = vmatprep.subr.bf16.mxu0 0
    %1990 = vmatpush1.bf16.msra.mxu0 %v1466
    %1991 = vmatprep.subr.bf16.mxu0 0
    %1992 = vmatpush2.bf16.msra.mxu0 %v1481
    %1993 = vmatprep.subr.bf16.mxu0 0
    %1994 = vmatpush2.bf16.msra.mxu0 %v1480
    %1995 = vmatprep.subr.bf16.mxu0 0
    %1996 = vmatpush2.bf16.msra.mxu0 %v1479
    %1997 = vmatprep.subr.bf16.mxu0 0
    %1998 = vmatpush2.bf16.msra.mxu0 %v1478
    %1999 = vmatprep.subr.bf16.mxu0 0
    %2000 = vmatpush2.bf16.msra.mxu0 %v1477
    %2001 = vmatprep.subr.bf16.mxu0 0
    %2002 = vmatpush2.bf16.msra.mxu0 %v1476
    %2003 = vmatprep.subr.bf16.mxu0 0
    %2004 = vmatpush2.bf16.msra.mxu0 %v1475
    %2005 = vmatprep.subr.bf16.mxu0 0
    %2006 = vmatpush2.bf16.msra.mxu0 %v1474
    %2007 = vmatprep.mubr.bf16.mxu0 %v581
    %2008 = vmatmul.mubr.bf16.gmra.mxu0 %v580
    %v2009 = vpop.f32.mrf.mxu0
    %v2010 = vadd.f32 %v1969, %v2009
    %v2011 = vpop.f32.mrf.mxu0
    %v2012 = vpop.f32.mrf.mxu0
    %v2013 = vadd.f32 %v1972, %v2012
    %v2014 = vpop.f32.mrf.mxu0
    %2015 = vdwg.mxu0
    %2016 = vmatprep.subr.bf16.mxu0 0
    %2017 = vmatpush1.bf16.msra.mxu0 %v1489
    %2018 = vmatprep.subr.bf16.mxu0 0
    %2019 = vmatpush1.bf16.msra.mxu0 %v1488
    %2020 = vmatprep.subr.bf16.mxu0 0
    %2021 = vmatpush1.bf16.msra.mxu0 %v1487
    %2022 = vmatprep.subr.bf16.mxu0 0
    %2023 = vmatpush1.bf16.msra.mxu0 %v1486
    %2024 = vmatprep.subr.bf16.mxu0 0
    %2025 = vmatpush1.bf16.msra.mxu0 %v1485
    %2026 = vmatprep.subr.bf16.mxu0 0
    %2027 = vmatpush1.bf16.msra.mxu0 %v1484
    %2028 = vmatprep.subr.bf16.mxu0 0
    %2029 = vmatpush1.bf16.msra.mxu0 %v1483
    %2030 = vmatprep.subr.bf16.mxu0 0
    %2031 = vmatpush1.bf16.msra.mxu0 %v1482
    %2032 = vmatprep.subr.bf16.mxu0 0
    %2033 = vmatpush2.bf16.msra.mxu0 %v1497
    %2034 = vmatprep.subr.bf16.mxu0 0
    %2035 = vmatpush2.bf16.msra.mxu0 %v1496
    %2036 = vmatprep.subr.bf16.mxu0 0
    %2037 = vmatpush2.bf16.msra.mxu0 %v1495
    %2038 = vmatprep.subr.bf16.mxu0 0
    %2039 = vmatpush2.bf16.msra.mxu0 %v1494
    %2040 = vmatprep.subr.bf16.mxu0 0
    %2041 = vmatpush2.bf16.msra.mxu0 %v1493
    %2042 = vmatprep.subr.bf16.mxu0 0
    %2043 = vmatpush2.bf16.msra.mxu0 %v1492
    %2044 = vmatprep.subr.bf16.mxu0 0
    %2045 = vmatpush2.bf16.msra.mxu0 %v1491
    %2046 = vmatprep.subr.bf16.mxu0 0
    %2047 = vmatpush2.bf16.msra.mxu0 %v1490
    %2048 = vmatprep.mubr.bf16.mxu0 %v583
    %2049 = vmatmul.mubr.bf16.gmra.mxu0 %v582
    %v2050 = vpop.f32.mrf.mxu0
    %v2051 = vadd.f32 %v2010, %v2050
    %v2052 = vpop.f32.mrf.mxu0
    %v2053 = vpop.f32.mrf.mxu0
    %v2054 = vadd.f32 %v2013, %v2053
    %v2055 = vpop.f32.mrf.mxu0
    %2056 = vdwg.mxu0
    %2057 = vmatprep.subr.bf16.mxu0 0
    %2058 = vmatpush1.bf16.msra.mxu0 %v1505
    %2059 = vmatprep.subr.bf16.mxu0 0
    %2060 = vmatpush1.bf16.msra.mxu0 %v1504
    %2061 = vmatprep.subr.bf16.mxu0 0
    %2062 = vmatpush1.bf16.msra.mxu0 %v1503
    %2063 = vmatprep.subr.bf16.mxu0 0
    %2064 = vmatpush1.bf16.msra.mxu0 %v1502
    %2065 = vmatprep.subr.bf16.mxu0 0
    %2066 = vmatpush1.bf16.msra.mxu0 %v1501
    %2067 = vmatprep.subr.bf16.mxu0 0
    %2068 = vmatpush1.bf16.msra.mxu0 %v1500
    %2069 = vmatprep.subr.bf16.mxu0 0
    %2070 = vmatpush1.bf16.msra.mxu0 %v1499
    %2071 = vmatprep.subr.bf16.mxu0 0
    %2072 = vmatpush1.bf16.msra.mxu0 %v1498
    %2073 = vmatprep.subr.bf16.mxu0 0
    %2074 = vmatpush2.bf16.msra.mxu0 %v1513
    %2075 = vmatprep.subr.bf16.mxu0 0
    %2076 = vmatpush2.bf16.msra.mxu0 %v1512
    %2077 = vmatprep.subr.bf16.mxu0 0
    %2078 = vmatpush2.bf16.msra.mxu0 %v1511
    %2079 = vmatprep.subr.bf16.mxu0 0
    %2080 = vmatpush2.bf16.msra.mxu0 %v1510
    %2081 = vmatprep.subr.bf16.mxu0 0
    %2082 = vmatpush2.bf16.msra.mxu0 %v1509
    %2083 = vmatprep.subr.bf16.mxu0 0
    %2084 = vmatpush2.bf16.msra.mxu0 %v1508
    %2085 = vmatprep.subr.bf16.mxu0 0
    %2086 = vmatpush2.bf16.msra.mxu0 %v1507
    %2087 = vmatprep.subr.bf16.mxu0 0
    %2088 = vmatpush2.bf16.msra.mxu0 %v1506
    %2089 = vmatprep.mubr.bf16.mxu0 %v585
    %2090 = vmatmul.mubr.bf16.gmra.mxu0 %v584
    %v2091 = vpop.f32.mrf.mxu0
    %v2092 = vadd.f32 %v2051, %v2091
    %v2093 = vpop.f32.mrf.mxu0
    %v2094 = vpop.f32.mrf.mxu0
    %v2095 = vadd.f32 %v2054, %v2094
    %v2096 = vpop.f32.mrf.mxu0
    %2097 = vdwg.mxu0
    %2098 = vmatprep.subr.bf16.mxu0 0
    %2099 = vmatpush1.bf16.msra.mxu0 %v1521
    %2100 = vmatprep.subr.bf16.mxu0 0
    %2101 = vmatpush1.bf16.msra.mxu0 %v1520
    %2102 = vmatprep.subr.bf16.mxu0 0
    %2103 = vmatpush1.bf16.msra.mxu0 %v1519
    %2104 = vmatprep.subr.bf16.mxu0 0
    %2105 = vmatpush1.bf16.msra.mxu0 %v1518
    %2106 = vmatprep.subr.bf16.mxu0 0
    %2107 = vmatpush1.bf16.msra.mxu0 %v1517
    %2108 = vmatprep.subr.bf16.mxu0 0
    %2109 = vmatpush1.bf16.msra.mxu0 %v1516
    %2110 = vmatprep.subr.bf16.mxu0 0
    %2111 = vmatpush1.bf16.msra.mxu0 %v1515
    %2112 = vmatprep.subr.bf16.mxu0 0
    %2113 = vmatpush1.bf16.msra.mxu0 %v1514
    %2114 = vmatprep.subr.bf16.mxu0 0
    %2115 = vmatpush2.bf16.msra.mxu0 %v1529
    %2116 = vmatprep.subr.bf16.mxu0 0
    %2117 = vmatpush2.bf16.msra.mxu0 %v1528
    %2118 = vmatprep.subr.bf16.mxu0 0
    %2119 = vmatpush2.bf16.msra.mxu0 %v1527
    %2120 = vmatprep.subr.bf16.mxu0 0
    %2121 = vmatpush2.bf16.msra.mxu0 %v1526
    %2122 = vmatprep.subr.bf16.mxu0 0
    %2123 = vmatpush2.bf16.msra.mxu0 %v1525
    %2124 = vmatprep.subr.bf16.mxu0 0
    %2125 = vmatpush2.bf16.msra.mxu0 %v1524
    %2126 = vmatprep.subr.bf16.mxu0 0
    %2127 = vmatpush2.bf16.msra.mxu0 %v1523
    %2128 = vmatprep.subr.bf16.mxu0 0
    %2129 = vmatpush2.bf16.msra.mxu0 %v1522
    %2130 = vmatprep.mubr.bf16.mxu0 %v587
    %2131 = vmatmul.mubr.bf16.gmra.mxu0 %v586
    %v2132 = vpop.f32.mrf.mxu0
    %v2133 = vadd.f32 %v2092, %v2132
    %v2134 = vpop.f32.mrf.mxu0
    %v2135 = vpop.f32.mrf.mxu0
    %v2136 = vadd.f32 %v2095, %v2135
    %v2137 = vpop.f32.mrf.mxu0
    %2138 = vdwg.mxu0
    %2139 = vmatprep.subr.bf16.mxu0 0
    %2140 = vmatpush1.bf16.msra.mxu0 %v1537
    %2141 = vmatprep.subr.bf16.mxu0 0
    %2142 = vmatpush1.bf16.msra.mxu0 %v1536
    %2143 = vmatprep.subr.bf16.mxu0 0
    %2144 = vmatpush1.bf16.msra.mxu0 %v1535
    %2145 = vmatprep.subr.bf16.mxu0 0
    %2146 = vmatpush1.bf16.msra.mxu0 %v1534
    %2147 = vmatprep.subr.bf16.mxu0 0
    %2148 = vmatpush1.bf16.msra.mxu0 %v1533
    %2149 = vmatprep.subr.bf16.mxu0 0
    %2150 = vmatpush1.bf16.msra.mxu0 %v1532
    %2151 = vmatprep.subr.bf16.mxu0 0
    %2152 = vmatpush1.bf16.msra.mxu0 %v1531
    %2153 = vmatprep.subr.bf16.mxu0 0
    %2154 = vmatpush1.bf16.msra.mxu0 %v1530
    %2155 = vmatprep.subr.bf16.mxu0 0
    %2156 = vmatpush2.bf16.msra.mxu0 %v1545
    %2157 = vmatprep.subr.bf16.mxu0 0
    %2158 = vmatpush2.bf16.msra.mxu0 %v1544
    %2159 = vmatprep.subr.bf16.mxu0 0
    %2160 = vmatpush2.bf16.msra.mxu0 %v1543
    %2161 = vmatprep.subr.bf16.mxu0 0
    %2162 = vmatpush2.bf16.msra.mxu0 %v1542
    %2163 = vmatprep.subr.bf16.mxu0 0
    %2164 = vmatpush2.bf16.msra.mxu0 %v1541
    %2165 = vmatprep.subr.bf16.mxu0 0
    %2166 = vmatpush2.bf16.msra.mxu0 %v1540
    %2167 = vmatprep.subr.bf16.mxu0 0
    %2168 = vmatpush2.bf16.msra.mxu0 %v1539
    %2169 = vmatprep.subr.bf16.mxu0 0
    %2170 = vmatpush2.bf16.msra.mxu0 %v1538
    %2171 = vmatprep.mubr.bf16.mxu0 %v589
    %2172 = vmatmul.mubr.bf16.gmra.mxu0 %v588
    %v2173 = vpop.f32.mrf.mxu0
    %v2174 = vadd.f32 %v2133, %v2173
    %v2175 = vpop.f32.mrf.mxu0
    %v2176 = vpop.f32.mrf.mxu0
    %v2177 = vadd.f32 %v2136, %v2176
    %v2178 = vpop.f32.mrf.mxu0
    %2179 = vdwg.mxu0
    %2180 = vmatprep.subr.bf16.mxu0 0
    %2181 = vmatpush1.bf16.msra.mxu0 %v1553
    %2182 = vmatprep.subr.bf16.mxu0 0
    %2183 = vmatpush1.bf16.msra.mxu0 %v1552
    %2184 = vmatprep.subr.bf16.mxu0 0
    %2185 = vmatpush1.bf16.msra.mxu0 %v1551
    %2186 = vmatprep.subr.bf16.mxu0 0
    %2187 = vmatpush1.bf16.msra.mxu0 %v1550
    %2188 = vmatprep.subr.bf16.mxu0 0
    %2189 = vmatpush1.bf16.msra.mxu0 %v1549
    %2190 = vmatprep.subr.bf16.mxu0 0
    %2191 = vmatpush1.bf16.msra.mxu0 %v1548
    %2192 = vmatprep.subr.bf16.mxu0 0
    %2193 = vmatpush1.bf16.msra.mxu0 %v1547
    %2194 = vmatprep.subr.bf16.mxu0 0
    %2195 = vmatpush1.bf16.msra.mxu0 %v1546
    %2196 = vmatprep.subr.bf16.mxu0 0
    %2197 = vmatpush2.bf16.msra.mxu0 %v1561
    %2198 = vmatprep.subr.bf16.mxu0 0
    %2199 = vmatpush2.bf16.msra.mxu0 %v1560
    %2200 = vmatprep.subr.bf16.mxu0 0
    %2201 = vmatpush2.bf16.msra.mxu0 %v1559
    %2202 = vmatprep.subr.bf16.mxu0 0
    %2203 = vmatpush2.bf16.msra.mxu0 %v1558
    %2204 = vmatprep.subr.bf16.mxu0 0
    %2205 = vmatpush2.bf16.msra.mxu0 %v1557
    %2206 = vmatprep.subr.bf16.mxu0 0
    %2207 = vmatpush2.bf16.msra.mxu0 %v1556
    %2208 = vmatprep.subr.bf16.mxu0 0
    %2209 = vmatpush2.bf16.msra.mxu0 %v1555
    %2210 = vmatprep.subr.bf16.mxu0 0
    %2211 = vmatpush2.bf16.msra.mxu0 %v1554
    %2212 = vmatprep.mubr.bf16.mxu0 %v591
    %2213 = vmatmul.mubr.bf16.gmra.mxu0 %v590
    %v2214 = vpop.f32.mrf.mxu0
    %v2215 = vadd.f32 %v2174, %v2214
    %v2216 = vpop.f32.mrf.mxu0
    %v2217 = vpop.f32.mrf.mxu0
    %v2218 = vadd.f32 %v2177, %v2217
    %v2219 = vpop.f32.mrf.mxu0
    %2220 = vdwg.mxu0
    %2221 = vmatprep.subr.bf16.mxu0 0
    %2222 = vmatpush1.bf16.msra.mxu0 %v1569
    %2223 = vmatprep.subr.bf16.mxu0 0
    %2224 = vmatpush1.bf16.msra.mxu0 %v1568
    %2225 = vmatprep.subr.bf16.mxu0 0
    %2226 = vmatpush1.bf16.msra.mxu0 %v1567
    %2227 = vmatprep.subr.bf16.mxu0 0
    %2228 = vmatpush1.bf16.msra.mxu0 %v1566
    %2229 = vmatprep.subr.bf16.mxu0 0
    %2230 = vmatpush1.bf16.msra.mxu0 %v1565
    %2231 = vmatprep.subr.bf16.mxu0 0
    %2232 = vmatpush1.bf16.msra.mxu0 %v1564
    %2233 = vmatprep.subr.bf16.mxu0 0
    %2234 = vmatpush1.bf16.msra.mxu0 %v1563
    %2235 = vmatprep.subr.bf16.mxu0 0
    %2236 = vmatpush1.bf16.msra.mxu0 %v1562
    %2237 = vmatprep.subr.bf16.mxu0 0
    %2238 = vmatpush2.bf16.msra.mxu0 %v1577
    %2239 = vmatprep.subr.bf16.mxu0 0
    %2240 = vmatpush2.bf16.msra.mxu0 %v1576
    %2241 = vmatprep.subr.bf16.mxu0 0
    %2242 = vmatpush2.bf16.msra.mxu0 %v1575
    %2243 = vmatprep.subr.bf16.mxu0 0
    %2244 = vmatpush2.bf16.msra.mxu0 %v1574
    %2245 = vmatprep.subr.bf16.mxu0 0
    %2246 = vmatpush2.bf16.msra.mxu0 %v1573
    %2247 = vmatprep.subr.bf16.mxu0 0
    %2248 = vmatpush2.bf16.msra.mxu0 %v1572
    %2249 = vmatprep.subr.bf16.mxu0 0
    %2250 = vmatpush2.bf16.msra.mxu0 %v1571
    %2251 = vmatprep.subr.bf16.mxu0 0
    %2252 = vmatpush2.bf16.msra.mxu0 %v1570
    %2253 = vmatprep.mubr.bf16.mxu0 %v593
    %2254 = vmatmul.mubr.bf16.gmra.mxu0 %v592
    %v2255 = vpop.f32.mrf.mxu0
    %v2256 = vadd.f32 %v2215, %v2255
    %v2257 = vpop.f32.mrf.mxu0
    %v2258 = vpop.f32.mrf.mxu0
    %v2259 = vadd.f32 %v2218, %v2258
    %v2260 = vpop.f32.mrf.mxu0
    %2261 = vdwg.mxu0
    %v2262 = vmax.f32 %v2256, 0.0
    %v2263 = vmax.f32 %v2259, 0.0
    %v2264 = vld [vmem:[#allocation7] sm:$0xff]
    %v2265 = vld [vmem:[#allocation7 + $0x8] sm:$0xff]
    %v2266 = vld [vmem:[#allocation7 + $0x10] sm:$0xff]
    %v2267 = vld [vmem:[#allocation7 + $0x18] sm:$0xff]
    %v2268 = vld [vmem:[#allocation7 + $0x20] sm:$0xff]
    %v2269 = vld [vmem:[#allocation7 + $0x28] sm:$0xff]
    %v2270 = vld [vmem:[#allocation7 + $0x30] sm:$0xff]
    %v2271 = vld [vmem:[#allocation7 + $0x38] sm:$0xff]
    %v2272 = vld [vmem:[#allocation7 + $0x40] sm:$0xff]
    %v2273 = vld [vmem:[#allocation7 + $0x48] sm:$0xff]
    %v2274 = vld [vmem:[#allocation7 + $0x50] sm:$0xff]
    %v2275 = vld [vmem:[#allocation7 + $0x58] sm:$0xff]
    %v2276 = vld [vmem:[#allocation7 + $0x60] sm:$0xff]
    %v2277 = vld [vmem:[#allocation7 + $0x68] sm:$0xff]
    %v2278 = vld [vmem:[#allocation7 + $0x70] sm:$0xff]
    %v2279 = vld [vmem:[#allocation7 + $0x78] sm:$0xff]
    %v2280 = vld [vmem:[%s4] sm:$0x1]
    %v2282 = vlaneseq
    %v2283 = vshrl.u32 %v2282, 7
    %v2284 = vsub.s32 0, %v2283
    %v2285 = vrot.slane %v2280, %v2284
    %2287 = vmatprep.subr.mxu0 0.0
    %2288 = vmatpush1.msra.mxu0 %v2279
    %2289 = vmatprep.subr.mxu0 0.0
    %2290 = vmatpush1.msra.mxu0 %v2278
    %2291 = vmatprep.subr.mxu0 0.0
    %2292 = vmatpush1.msra.mxu0 %v2277
    %2293 = vmatprep.subr.mxu0 0.0
    %2294 = vmatpush1.msra.mxu0 %v2276
    %2295 = vmatprep.subr.mxu0 0.0
    %2296 = vmatpush1.msra.mxu0 %v2275
    %2297 = vmatprep.subr.mxu0 0.0
    %2298 = vmatpush1.msra.mxu0 %v2274
    %2299 = vmatprep.subr.mxu0 0.0
    %2300 = vmatpush1.msra.mxu0 %v2273
    %2301 = vmatprep.subr.mxu0 0.0
    %2302 = vmatpush1.msra.mxu0 %v2272
    %2303 = vmatprep.subr.mxu0 0.0
    %2304 = vmatpush1.msra.mxu0 %v2271
    %2305 = vmatprep.subr.mxu0 0.0
    %2306 = vmatpush1.msra.mxu0 %v2270
    %2307 = vmatprep.subr.mxu0 0.0
    %2308 = vmatpush1.msra.mxu0 %v2269
    %2309 = vmatprep.subr.mxu0 0.0
    %2310 = vmatpush1.msra.mxu0 %v2268
    %2311 = vmatprep.subr.mxu0 0.0
    %2312 = vmatpush1.msra.mxu0 %v2267
    %2313 = vmatprep.subr.mxu0 0.0
    %2314 = vmatpush1.msra.mxu0 %v2266
    %2315 = vmatprep.subr.mxu0 0.0
    %2316 = vmatpush1.msra.mxu0 %v2265
    %2317 = vmatprep.subr.mxu0 0.0
    %2318 = vmatpush1.msra.mxu0 %v2264
    %2319 = vmatprep.subr.mxu0 0.0
    %2320 = vmatpush2.msra.mxu0 0.0
    %2321 = vmatprep.subr.mxu0 0.0
    %2322 = vmatpush2.msra.mxu0 0.0
    %2323 = vmatprep.subr.mxu0 0.0
    %2324 = vmatpush2.msra.mxu0 0.0
    %2325 = vmatprep.subr.mxu0 0.0
    %2326 = vmatpush2.msra.mxu0 0.0
    %2327 = vmatprep.subr.mxu0 0.0
    %2328 = vmatpush2.msra.mxu0 0.0
    %2329 = vmatprep.subr.mxu0 0.0
    %2330 = vmatpush2.msra.mxu0 0.0
    %2331 = vmatprep.subr.mxu0 0.0
    %2332 = vmatpush2.msra.mxu0 0.0
    %2333 = vmatprep.subr.mxu0 0.0
    %2334 = vmatpush2.msra.mxu0 0.0
    %2335 = vmatprep.subr.mxu0 0.0
    %2336 = vmatpush2.msra.mxu0 0.0
    %2337 = vmatprep.subr.mxu0 0.0
    %2338 = vmatpush2.msra.mxu0 0.0
    %2339 = vmatprep.subr.mxu0 0.0
    %2340 = vmatpush2.msra.mxu0 0.0
    %2341 = vmatprep.subr.mxu0 0.0
    %2342 = vmatpush2.msra.mxu0 0.0
    %2343 = vmatprep.subr.mxu0 0.0
    %2344 = vmatpush2.msra.mxu0 0.0
    %2345 = vmatprep.subr.mxu0 0.0
    %2346 = vmatpush2.msra.mxu0 0.0
    %2347 = vmatprep.subr.mxu0 0.0
    %2348 = vmatpush2.msra.mxu0 0.0
    %2349 = vmatprep.subr.mxu0 0.0
    %2350 = vmatpush2.msra.mxu0 0.0
    %2351 = vmatprep.mubr.f32.mxu0 0.0
    %2352 = vmatmul.mubr.f32.gmra.mxu0 %v2262
    %v2353 = vpop.f32.mrf.mxu0
    %v2354 = vadd.f32 %v2285, %v2353
    %v2355 = vpop.f32.mrf.mxu0
    %2356 = vmatprep.mubr.f32.mxu0 0.0
    %2357 = vmatmul.mubr.f32.gmra.mxu0 %v2263
    %v2358 = vpop.f32.mrf.mxu0
    %v2359 = vadd.f32 %v2285, %v2358
    %v2360 = vpop.f32.mrf.mxu0
    %2361 = vdwg.mxu0
    %v2362 = vmax.f32 %v2354, 0.0
    %v2363 = vmax.f32 %v2359, 0.0
    %v2364 = vld [vmem:[#allocation8] sm:$0xff]
    %v2365 = vld [vmem:[#allocation8 + $0x8] sm:$0xff]
    %v2366 = vld [vmem:[#allocation8 + $0x10] sm:$0xff]
    %v2367 = vld [vmem:[#allocation8 + $0x18] sm:$0xff]
    %v2368 = vld [vmem:[#allocation8 + $0x20] sm:$0xff]
    %v2369 = vld [vmem:[#allocation8 + $0x28] sm:$0xff]
    %v2370 = vld [vmem:[#allocation8 + $0x30] sm:$0xff]
    %v2371 = vld [vmem:[#allocation8 + $0x38] sm:$0xff]
    %v2372 = vld [vmem:[#allocation8 + $0x40] sm:$0xff]
    %v2373 = vld [vmem:[#allocation8 + $0x48] sm:$0xff]
    %v2374 = vld [vmem:[#allocation8 + $0x50] sm:$0xff]
    %v2375 = vld [vmem:[#allocation8 + $0x58] sm:$0xff]
    %v2376 = vld [vmem:[#allocation8 + $0x60] sm:$0xff]
    %v2377 = vld [vmem:[#allocation8 + $0x68] sm:$0xff]
    %v2378 = vld [vmem:[#allocation8 + $0x70] sm:$0xff]
    %v2379 = vld [vmem:[#allocation8 + $0x78] sm:$0xff]
    %v2380 = vld [vmem:[%s6] sm:$0x1]
    %v2382 = vlaneseq
    %v2383 = vshrl.u32 %v2382, 7
    %v2384 = vsub.s32 0, %v2383
    %v2385 = vrot.slane %v2380, %v2384
    %2387 = vmatprep.subr.mxu0 0.0
    %2388 = vmatpush1.msra.mxu0 %v2379
    %2389 = vmatprep.subr.mxu0 0.0
    %2390 = vmatpush1.msra.mxu0 %v2378
    %2391 = vmatprep.subr.mxu0 0.0
    %2392 = vmatpush1.msra.mxu0 %v2377
    %2393 = vmatprep.subr.mxu0 0.0
    %2394 = vmatpush1.msra.mxu0 %v2376
    %2395 = vmatprep.subr.mxu0 0.0
    %2396 = vmatpush1.msra.mxu0 %v2375
    %2397 = vmatprep.subr.mxu0 0.0
    %2398 = vmatpush1.msra.mxu0 %v2374
    %2399 = vmatprep.subr.mxu0 0.0
    %2400 = vmatpush1.msra.mxu0 %v2373
    %2401 = vmatprep.subr.mxu0 0.0
    %2402 = vmatpush1.msra.mxu0 %v2372
    %2403 = vmatprep.subr.mxu0 0.0
    %2404 = vmatpush1.msra.mxu0 %v2371
    %2405 = vmatprep.subr.mxu0 0.0
    %2406 = vmatpush1.msra.mxu0 %v2370
    %2407 = vmatprep.subr.mxu0 0.0
    %2408 = vmatpush1.msra.mxu0 %v2369
    %2409 = vmatprep.subr.mxu0 0.0
    %2410 = vmatpush1.msra.mxu0 %v2368
    %2411 = vmatprep.subr.mxu0 0.0
    %2412 = vmatpush1.msra.mxu0 %v2367
    %2413 = vmatprep.subr.mxu0 0.0
    %2414 = vmatpush1.msra.mxu0 %v2366
    %2415 = vmatprep.subr.mxu0 0.0
    %2416 = vmatpush1.msra.mxu0 %v2365
    %2417 = vmatprep.subr.mxu0 0.0
    %2418 = vmatpush1.msra.mxu0 %v2364
    %2419 = vmatprep.subr.mxu0 0.0
    %2420 = vmatpush2.msra.mxu0 0.0
    %2421 = vmatprep.subr.mxu0 0.0
    %2422 = vmatpush2.msra.mxu0 0.0
    %2423 = vmatprep.subr.mxu0 0.0
    %2424 = vmatpush2.msra.mxu0 0.0
    %2425 = vmatprep.subr.mxu0 0.0
    %2426 = vmatpush2.msra.mxu0 0.0
    %2427 = vmatprep.subr.mxu0 0.0
    %2428 = vmatpush2.msra.mxu0 0.0
    %2429 = vmatprep.subr.mxu0 0.0
    %2430 = vmatpush2.msra.mxu0 0.0
    %2431 = vmatprep.subr.mxu0 0.0
    %2432 = vmatpush2.msra.mxu0 0.0
    %2433 = vmatprep.subr.mxu0 0.0
    %2434 = vmatpush2.msra.mxu0 0.0
    %2435 = vmatprep.subr.mxu0 0.0
    %2436 = vmatpush2.msra.mxu0 0.0
    %2437 = vmatprep.subr.mxu0 0.0
    %2438 = vmatpush2.msra.mxu0 0.0
    %2439 = vmatprep.subr.mxu0 0.0
    %2440 = vmatpush2.msra.mxu0 0.0
    %2441 = vmatprep.subr.mxu0 0.0
    %2442 = vmatpush2.msra.mxu0 0.0
    %2443 = vmatprep.subr.mxu0 0.0
    %2444 = vmatpush2.msra.mxu0 0.0
    %2445 = vmatprep.subr.mxu0 0.0
    %2446 = vmatpush2.msra.mxu0 0.0
    %2447 = vmatprep.subr.mxu0 0.0
    %2448 = vmatpush2.msra.mxu0 0.0
    %2449 = vmatprep.subr.mxu0 0.0
    %2450 = vmatpush2.msra.mxu0 0.0
    %2451 = vmatprep.mubr.f32.mxu0 0.0
    %2452 = vmatmul.mubr.f32.gmra.mxu0 %v2362
    %v2453 = vpop.f32.mrf.mxu0
    %v2454 = vadd.f32 %v2385, %v2453
    %v2455 = vpop.f32.mrf.mxu0
    %2456 = vmatprep.mubr.f32.mxu0 0.0
    %2457 = vmatmul.mubr.f32.gmra.mxu0 %v2363
    %v2458 = vpop.f32.mrf.mxu0
    %v2459 = vadd.f32 %v2385, %v2458
    %v2460 = vpop.f32.mrf.mxu0
    %2461 = vdwg.mxu0
    %v2462 = vlaneseq
    %v2463 = vand.u32 %v2462, 127
    %vm2464 = vcmp.lt.s32.totalorder %v2463, 10
    %v2465 = vsel %vm2464, %v2454, -inf
    %v2466 = vsel %vm2464, %v2459, -inf
    %2467 = vmax.xlane.f32.xlu0 %v2465
    %v2468 = vpop.xlane.xlu0 %2467
    %2469 = vmax.xlane.f32.xlu0 %v2466
    %v2470 = vpop.xlane.xlu0 %2469
    %v2471 = vsub.f32 %v2454, %v2468
    %v2472 = vsub.f32 %v2459, %v2470
    %v2473 = vmul.f32 %v2471, 1.442695
    %v2474 = vpow.pop %v2473
    %v2475 = vmul.f32 %v2472, 1.442695
    %v2476 = vpow.pop %v2475
    %v2477 = vsel %vm2464, %v2474, 0.0
    %v2478 = vsel %vm2464, %v2476, 0.0
    %2479 = vadd.xlane.f32.xlu0 %v2477
    %v2480 = vpop.xlane.xlu0 %2479
    %2481 = vadd.xlane.f32.xlu0 %v2478
    %v2482 = vpop.xlane.xlu0 %2481
    %v2483 = vlog2.pop %v2480
    %v2484 = vmul.f32 %v2483, 0.6931472
    %v2485 = vlog2.pop %v2482
    %v2486 = vmul.f32 %v2485, 0.6931472
    %v2487 = vsub.f32 %v2471, %v2484
    %v2488 = vsub.f32 %v2472, %v2486
    %2489 = vst [vmem:[#allocation10] sm:$0xff] %v2487
    %2490 = vst [vmem:[#allocation10 + $0x8] sm:$0xff] %v2488
    // Predicated region
    $region46: #{tpu_custom_call.1} parent=1 // pred_check
      _
    $region47: #{tpu_custom_call.1} parent=1 // pred_check_branch
      %2492 = sbr.rel (0) target = $region49
    $region48: #{tpu_custom_call.1} parent=1 // pred_region
      %s2494 = ssub.s32 256, 256
      %2495 = vsyncadd [#allocation4], %s2494
      %s2496 = sshll.u32 [#allocation10], 4
      %s2497 = int_to_ptr.vmem [resolvable:$true] %s2496
      %2502 = dma.vmem_to_hbm [thread:$0]  %s2497, 256, %s7, [#allocation4], 128, 128, 8
    $region49: #{tpu_custom_call.1} parent=1 // pred_fallthru
      _
    // Predicated region
    $region50: #{tpu_custom_call.1} parent=1 // pred_check
      _
    $region51: #{tpu_custom_call.1} parent=1 // pred_check_branch
      %2504 = sbr.rel (0) target = $region53
    $region52: #{tpu_custom_call.1} parent=1 // pred_region
      %2505 = dma.done [#allocation4], 256
    $region53: #{tpu_custom_call.1} parent=1 // pred_fallthru
      _
    %2506 = vsyncpa [#allocation3], 1
    %2507 = vsyncpa [#allocation6], 1
    %2508 = vsyncpa [#allocation9], 1
    %2509 = vsyncpa [#allocation4], 1

</llo_original>
